<compile_context>
chip_gen: v7x
topology: tpu7x:2x2x1
jax: 0.10.0
libtpu: 0.0.40
codegen_flags: <defaults>
</compile_context>

<pallas_src>
import functools

import jax
import jax.numpy as jnp
from jax import lax
from jax.experimental import pallas as pl
from jax.experimental.pallas import tpu as pltpu


_LN_EPS = 1e-5
_GELU_C = 0.7978845608028654  # sqrt(2/pi)


def _gelu_tanh(x):
    return 0.5 * x * (1.0 + jnp.tanh(_GELU_C * (x + 0.044715 * x * x * x)))


def _layer_norm(x, g, b):
    mu = jnp.mean(x, axis=-1, keepdims=True)
    xc = x - mu
    var = jnp.mean(xc * xc, axis=-1, keepdims=True)
    return xc * lax.rsqrt(var + _LN_EPS) * g + b


def _encoder_layer_kernel(x_ref, ln_g_ref, ln_b_ref, wq_ref, wk_ref, wv_ref,
                          wo_ref, w1_ref, b1_ref, w2_ref, b2_ref, out_ref,
                          x_scr, o_slab, *, head_num, dim_QK, dim_V):
    """One grid step = one (batch element, layer). x carried in x_scr (f32)."""
    d = pl.program_id(1)

    @pl.when(d == 0)
    def _():
        x_scr[...] = x_ref[0].astype(jnp.float32)

    x = x_scr[...]                                   # (L, D) f32
    g = ln_g_ref[0]                                  # (1, D) f32 (shared by both LNs)
    beta = ln_b_ref[0]                               # (1, D) f32

    # ---- sub-block 1: LayerNorm -> multi-head self-attention -> residual ----
    h = _layer_norm(x, g, beta).astype(jnp.bfloat16)
    # Fused all-head projections (1/sqrt(dim_QK) folded into Wq in the wrapper).
    qh = jnp.dot(h, wq_ref[0], preferred_element_type=jnp.float32)   # (L, H*dqk)
    kh = jnp.dot(h, wk_ref[0], preferred_element_type=jnp.float32)   # (L, H*dqk)
    vh = jnp.dot(h, wv_ref[0], preferred_element_type=jnp.float32)   # (L, H*dV)
    vh = vh.astype(jnp.bfloat16)

    for hh in range(head_num):                       # static head loop
        qs = qh[:, hh * dim_QK:(hh + 1) * dim_QK].astype(jnp.bfloat16)
        ks = kh[:, hh * dim_QK:(hh + 1) * dim_QK].astype(jnp.bfloat16)
        vs = vh[:, hh * dim_V:(hh + 1) * dim_V]
        # scores: contract last dims directly (no kh.T relayout in-kernel)
        s = lax.dot_general(qs, ks, (((1,), (1,)), ((), ())),
                            preferred_element_type=jnp.float32)      # (L, L) f32
        s = s - jnp.max(s, axis=-1, keepdims=True)
        p = jnp.exp(s)
        inv = pl.reciprocal(jnp.sum(p, axis=-1, keepdims=True), approx=True)
        pv = jnp.dot(p.astype(jnp.bfloat16), vs,
                     preferred_element_type=jnp.float32)             # (L, dV) f32
        # Normalise AFTER the PV matmul (L*dV mults instead of L*L).
        o_slab[:, hh * dim_V:(hh + 1) * dim_V] = inv * pv

    attn = jnp.dot(o_slab[...].astype(jnp.bfloat16), wo_ref[0],
                   preferred_element_type=jnp.float32)               # (L, D) f32
    x = x + attn                                     # dropout: inference no-op

    # ---- sub-block 2: LayerNorm (same params, per the module) -> MLP -> residual
    h2 = _layer_norm(x, g, beta).astype(jnp.bfloat16)
    m = jnp.dot(h2, w1_ref[0], preferred_element_type=jnp.float32) + b1_ref[0]
    m = _gelu_tanh(m).astype(jnp.bfloat16)
    m = jnp.dot(m, w2_ref[0], preferred_element_type=jnp.float32) + b2_ref[0]
    x = x + m

    x_scr[...] = x

    @pl.when(d == pl.num_programs(1) - 1)
    def _():
        out_ref[0] = x.astype(out_ref.dtype)


def transformer_encoder(x, params, *, head_num):
    """x: (B, L, D). params: per-layer weights stacked along a leading depth
    axis, in the PyTorch nn.Linear convention (out_features, in_features)."""
    B, L, D = x.shape
    depth = params["ln_g"].shape[0]
    dim_QK = D // head_num
    dim_V = D // head_num
    HQ = head_num * dim_QK
    HV = head_num * dim_V
    D2 = 2 * D
    scale = 1.0 / (dim_QK ** 0.5)

    f32, bf16 = jnp.float32, jnp.bfloat16

    # One-time layout plumbing: transpose Linear weights to (in, out), fold the
    # attention scale into Wq, convert MXU operands to bf16; keep LN params and
    # biases f32.
    ln_g = params["ln_g"].reshape(depth, 1, D).astype(f32)
    ln_b = params["ln_b"].reshape(depth, 1, D).astype(f32)
    wq_t = (jnp.transpose(params["w_q"], (0, 2, 1)) * scale).astype(bf16)
    wk_t = jnp.transpose(params["w_k"], (0, 2, 1)).astype(bf16)      # (depth, D, HQ)
    wv_t = jnp.transpose(params["w_v"], (0, 2, 1)).astype(bf16)      # (depth, D, HV)
    wo_t = jnp.transpose(params["w_out"], (0, 2, 1)).astype(bf16)    # (depth, HV, D)
    w1_t = jnp.transpose(params["w1"], (0, 2, 1)).astype(bf16)       # (depth, D, 2D)
    b1 = params["b1"].reshape(depth, 1, D2).astype(f32)
    w2_t = jnp.transpose(params["w2"], (0, 2, 1)).astype(bf16)       # (depth, 2D, D)
    b2 = params["b2"].reshape(depth, 1, D).astype(f32)
    weights = (ln_g, ln_b, wq_t, wk_t, wv_t, wo_t, w1_t, b1, w2_t, b2)

    def per_layer(a):
        # Stream one layer's tensor per depth grid step (double-buffered DMA).
        tail = a.shape[1:]
        return pl.BlockSpec((1,) + tail,
                            lambda b, d, _n=len(tail): (d,) + (0,) * _n)

    kernel = functools.partial(_encoder_layer_kernel, head_num=head_num,
                               dim_QK=dim_QK, dim_V=dim_V)

    grid_spec = pltpu.PrefetchScalarGridSpec(
        num_scalar_prefetch=0,
        grid=(B, depth),
        in_specs=[pl.BlockSpec((1, L, D), lambda b, d: (b, 0, 0))]
                 + [per_layer(w) for w in weights],
        out_specs=pl.BlockSpec((1, L, D), lambda b, d: (b, 0, 0)),
        scratch_shapes=[pltpu.VMEM((L, D), f32),    # running activation carry
                        pltpu.VMEM((L, HV), f32)],  # per-head attention slab
    )

    flops_layer = (2 * L * D * HQ * 2                          # Q, K projections
                   + 2 * L * D * HV                             # V projection
                   + 2 * head_num * L * L * (dim_QK + dim_V)    # QK^T, PV
                   + 2 * L * HV * D                             # output projection
                   + 2 * L * D * D2 * 2)                        # MLP
    weight_bytes = sum(int(w.size) * w.dtype.itemsize for w in weights)
    cost = pl.CostEstimate(
        flops=int(B * depth * flops_layer),
        transcendentals=int(B * depth * (head_num * L * L + L * D2)),
        bytes_accessed=int(2 * B * L * D * 4 + B * weight_bytes),
    )

    return pl.pallas_call(
        kernel,
        out_shape=jax.ShapeDtypeStruct((B, L, D), jnp.float32),
        grid_spec=grid_spec,
        compiler_params=pltpu.CompilerParams(
            dimension_semantics=("parallel", "arbitrary")),
        cost_estimate=cost,
    )(x, *weights)


def _reference(x, params, head_num):
    """Pure-JAX f32 reference mirroring the PyTorch TransformerEncoder forward
    (mask=None, dropout=identity, shared LN per layer, tanh-GELU as in-kernel)."""
    depth = params["ln_g"].shape[0]
    B, L, D = x.shape
    dqk = dv = D // head_num

    def ln(h, g, b):
        mu = h.mean(-1, keepdims=True)
        var = ((h - mu) ** 2).mean(-1, keepdims=True)
        return (h - mu) / jnp.sqrt(var + _LN_EPS) * g + b

    q = x
    for d in range(depth):
        g, b = params["ln_g"][d], params["ln_b"][d]
        h = ln(q, g, b)
        Q = h @ params["w_q"][d].T
        K = h @ params["w_k"][d].T
        V = h @ params["w_v"][d].T
        Q = Q.reshape(B, L, head_num, dqk).transpose(0, 2, 1, 3)
        K = K.reshape(B, L, head_num, dqk).transpose(0, 2, 1, 3)
        V = V.reshape(B, L, head_num, dv).transpose(0, 2, 1, 3)
        S = jnp.einsum("bhqd,bhkd->bhqk", Q, K) / (dqk ** 0.5)
        P = jax.nn.softmax(S, axis=3)
        O = jnp.einsum("bhqk,bhkd->bhqd", P, V)
        O = O.transpose(0, 2, 1, 3).reshape(B, L, head_num * dv)
        q = q + O @ params["w_out"][d].T
        h2 = ln(q, g, b)
        m = h2 @ params["w1"][d].T + params["b1"][d]
        m = _gelu_tanh(m)
        m = m @ params["w2"][d].T + params["b2"][d]
        q = q + m
    return q


if __name__ == "__main__":
    # Small shapes consistent with the module: dim_q=32, head_num=4 -> per-head 8.
    dim_q = 32
    head_num = 4
    depth = 2
    B, L = 2, 8
    D2 = dim_q * 2
    hd = dim_q  # head_num * (dim_q // head_num)

    key = jax.random.PRNGKey(0)
    ks = jax.random.split(key, 12)

    x = jax.random.normal(ks[0], (B, L, dim_q), dtype=jnp.float32)

    params = {
        "ln_g": 1.0 + 0.1 * jax.random.normal(ks[1], (depth, dim_q), dtype=jnp.float32),
        "ln_b": 0.1 * jax.random.normal(ks[2], (depth, dim_q), dtype=jnp.float32),
        "w_q": 0.1 * jax.random.normal(ks[3], (depth, hd, dim_q), dtype=jnp.float32),
        "w_k": 0.1 * jax.random.normal(ks[4], (depth, hd, dim_q), dtype=jnp.float32),
        "w_v": 0.1 * jax.random.normal(ks[5], (depth, hd, dim_q), dtype=jnp.float32),
        "w_out": 0.1 * jax.random.normal(ks[6], (depth, dim_q, hd), dtype=jnp.float32),
        "w1": 0.1 * jax.random.normal(ks[7], (depth, D2, dim_q), dtype=jnp.float32),
        "b1": 0.1 * jax.random.normal(ks[8], (depth, D2), dtype=jnp.float32),
        "w2": 0.1 * jax.random.normal(ks[9], (depth, dim_q, D2), dtype=jnp.float32),
        "b2": 0.1 * jax.random.normal(ks[10], (depth, dim_q), dtype=jnp.float32),
    }

    out = transformer_encoder(x, params, head_num=head_num)
    out = jax.block_until_ready(out)

    ref = _reference(x, params, head_num)
    assert out.shape == (B, L, dim_q)
    # Tolerance covers bf16 MXU operands and the EUP approx-reciprocal softmax.
    err = float(jnp.max(jnp.abs(out - ref)))
    assert err < 7.5e-2, f"mismatch vs reference: max abs err {err}"

    print("KERNEL_OK")
</pallas_src>

<mosaic_0001>
module attributes {stable_mosaic.version = 11 : i64} {
  func.func @_encoder_layer_kernel(%arg0: i32, %arg1: i32, %arg2: memref<1x8x32xf32, #tpu.memory_space<vmem>>, %arg3: memref<1x1x32xf32, #tpu.memory_space<vmem>>, %arg4: memref<1x1x32xf32, #tpu.memory_space<vmem>>, %arg5: memref<1x32x32xbf16, #tpu.memory_space<vmem>>, %arg6: memref<1x32x32xbf16, #tpu.memory_space<vmem>>, %arg7: memref<1x32x32xbf16, #tpu.memory_space<vmem>>, %arg8: memref<1x32x32xbf16, #tpu.memory_space<vmem>>, %arg9: memref<1x32x64xbf16, #tpu.memory_space<vmem>>, %arg10: memref<1x1x64xf32, #tpu.memory_space<vmem>>, %arg11: memref<1x64x32xbf16, #tpu.memory_space<vmem>>, %arg12: memref<1x1x32xf32, #tpu.memory_space<vmem>>, %arg13: memref<1x8x32xf32, #tpu.memory_space<vmem>>, %arg14: memref<8x32xf32, #tpu.memory_space<vmem>>, %arg15: memref<8x32xf32, #tpu.memory_space<vmem>>) attributes {dimension_semantics = [#tpu.dimension_semantics<parallel>, #tpu.dimension_semantics<arbitrary>], iteration_bounds = array<i64: 2, 2>, scalar_prefetch = 0 : i64, scratch_operands = 2 : i64, tpu.core_type = #tpu.core_type<tc>, window_params = [{transform_indices = @transform_0, window_bounds = array<i64: 1, 8, 32>}, {transform_indices = @transform_1, window_bounds = array<i64: 1, 1, 32>}, {transform_indices = @transform_2, window_bounds = array<i64: 1, 1, 32>}, {transform_indices = @transform_3, window_bounds = array<i64: 1, 32, 32>}, {transform_indices = @transform_4, window_bounds = array<i64: 1, 32, 32>}, {transform_indices = @transform_5, window_bounds = array<i64: 1, 32, 32>}, {transform_indices = @transform_6, window_bounds = array<i64: 1, 32, 32>}, {transform_indices = @transform_7, window_bounds = array<i64: 1, 32, 64>}, {transform_indices = @transform_8, window_bounds = array<i64: 1, 1, 64>}, {transform_indices = @transform_9, window_bounds = array<i64: 1, 64, 32>}, {transform_indices = @transform_10, window_bounds = array<i64: 1, 1, 32>}, {transform_indices = @transform_11, window_bounds = array<i64: 1, 8, 32>}]} {
    %c0_i32 = arith.constant 0 : i32
    %0 = arith.cmpi eq, %arg1, %c0_i32 : i32
    %1 = arith.extui %0 : i1 to i32
    %c0_i32_0 = arith.constant 0 : i32
    %2 = arith.cmpi ne, %1, %c0_i32_0 : i32
    scf.if %2 {
      %c0_77 = arith.constant 0 : index
      %c0_78 = arith.constant 0 : index
      %c0_79 = arith.constant 0 : index
      %175 = vector.load %arg2[%c0_77, %c0_78, %c0_79] : memref<1x8x32xf32, #tpu.memory_space<vmem>>, vector<1x8x32xf32>
      %176 = vector.shape_cast %175 : vector<1x8x32xf32> to vector<8x32xf32>
      %c0_80 = arith.constant 0 : index
      %c0_81 = arith.constant 0 : index
      %177 = vector.load %arg14[%c0_80, %c0_81] : memref<8x32xf32, #tpu.memory_space<vmem>>, vector<8x32xf32>
      tpu.vector_store %arg14[%c0_80, %c0_81], %176 {strides = array<i32>} : memref<8x32xf32, #tpu.memory_space<vmem>>, vector<8x32xf32>,
    } else {
    }
    %c0 = arith.constant 0 : index
    %c0_1 = arith.constant 0 : index
    %3 = vector.load %arg14[%c0, %c0_1] : memref<8x32xf32, #tpu.memory_space<vmem>>, vector<8x32xf32>
    %c0_2 = arith.constant 0 : index
    %c0_3 = arith.constant 0 : index
    %c0_4 = arith.constant 0 : index
    %4 = vector.load %arg3[%c0_2, %c0_3, %c0_4] : memref<1x1x32xf32, #tpu.memory_space<vmem>>, vector<1x1x32xf32>
    %5 = vector.shape_cast %4 : vector<1x1x32xf32> to vector<1x32xf32>
    %c0_5 = arith.constant 0 : index
    %c0_6 = arith.constant 0 : index
    %c0_7 = arith.constant 0 : index
    %6 = vector.load %arg4[%c0_5, %c0_6, %c0_7] : memref<1x1x32xf32, #tpu.memory_space<vmem>>, vector<1x1x32xf32>
    %7 = vector.shape_cast %6 : vector<1x1x32xf32> to vector<1x32xf32>
    %cst = arith.constant dense<0.000000e+00> : vector<8xf32>
    %8 = vector.multi_reduction <add>, %3, %cst [1] : vector<8x32xf32> to vector<8xf32>
    %9 = vector.shape_cast %8 : vector<8xf32> to vector<8x1xf32>
    %cst_8 = arith.constant 3.200000e+01 : f32
    %10 = vector.broadcast %cst_8 : f32 to vector<8x1xf32>
    %11 = arith.divf %9, %10 : vector<8x1xf32>
    %12 = vector.broadcast %11 : vector<8x1xf32> to vector<8x32xf32>
    %13 = arith.subf %3, %12 : vector<8x32xf32>
    %14 = arith.mulf %13, %13 : vector<8x32xf32>
    %cst_9 = arith.constant dense<0.000000e+00> : vector<8xf32>
    %15 = vector.multi_reduction <add>, %14, %cst_9 [1] : vector<8x32xf32> to vector<8xf32>
    %16 = vector.shape_cast %15 : vector<8xf32> to vector<8x1xf32>
    %cst_10 = arith.constant 3.200000e+01 : f32
    %17 = vector.broadcast %cst_10 : f32 to vector<8x1xf32>
    %18 = arith.divf %16, %17 : vector<8x1xf32>
    %cst_11 = arith.constant 9.99999974E-6 : f32
    %19 = vector.broadcast %cst_11 : f32 to vector<8x1xf32>
    %20 = arith.addf %18, %19 : vector<8x1xf32>
    %21 = math.rsqrt %20 : vector<8x1xf32>
    %22 = vector.broadcast %21 : vector<8x1xf32> to vector<8x32xf32>
    %23 = arith.mulf %13, %22 : vector<8x32xf32>
    %24 = vector.broadcast %5 : vector<1x32xf32> to vector<8x32xf32>
    %25 = arith.mulf %23, %24 : vector<8x32xf32>
    %26 = vector.broadcast %7 : vector<1x32xf32> to vector<8x32xf32>
    %27 = arith.addf %25, %26 : vector<8x32xf32>
    %28 = arith.truncf %27 : vector<8x32xf32> to vector<8x32xbf16>
    %c0_12 = arith.constant 0 : index
    %c0_13 = arith.constant 0 : index
    %c0_14 = arith.constant 0 : index
    %29 = vector.load %arg5[%c0_12, %c0_13, %c0_14] : memref<1x32x32xbf16, #tpu.memory_space<vmem>>, vector<1x32x32xbf16>
    %30 = vector.shape_cast %29 : vector<1x32x32xbf16> to vector<32x32xbf16>
    %cst_15 = arith.constant dense<0.000000e+00> : vector<8x32xf32>
    %31 = tpu.matmul %28, %30, %cst_15 {dimension_numbers = #tpu.dot_dimension_numbers<[1], [0], [0], [1], [0, 0, 1, 1], [], []>} : vector<8x32xbf16>, vector<32x32xbf16>, vector<8x32xf32> -> vector<8x32xf32>
    %c0_16 = arith.constant 0 : index
    %c0_17 = arith.constant 0 : index
    %c0_18 = arith.constant 0 : index
    %32 = vector.load %arg6[%c0_16, %c0_17, %c0_18] : memref<1x32x32xbf16, #tpu.memory_space<vmem>>, vector<1x32x32xbf16>
    %33 = vector.shape_cast %32 : vector<1x32x32xbf16> to vector<32x32xbf16>
    %cst_19 = arith.constant dense<0.000000e+00> : vector<8x32xf32>
    %34 = tpu.matmul %28, %33, %cst_19 {dimension_numbers = #tpu.dot_dimension_numbers<[1], [0], [0], [1], [0, 0, 1, 1], [], []>} : vector<8x32xbf16>, vector<32x32xbf16>, vector<8x32xf32> -> vector<8x32xf32>
    %c0_20 = arith.constant 0 : index
    %c0_21 = arith.constant 0 : index
    %c0_22 = arith.constant 0 : index
    %35 = vector.load %arg7[%c0_20, %c0_21, %c0_22] : memref<1x32x32xbf16, #tpu.memory_space<vmem>>, vector<1x32x32xbf16>
    %36 = vector.shape_cast %35 : vector<1x32x32xbf16> to vector<32x32xbf16>
    %cst_23 = arith.constant dense<0.000000e+00> : vector<8x32xf32>
    %37 = tpu.matmul %28, %36, %cst_23 {dimension_numbers = #tpu.dot_dimension_numbers<[1], [0], [0], [1], [0, 0, 1, 1], [], []>} : vector<8x32xbf16>, vector<32x32xbf16>, vector<8x32xf32> -> vector<8x32xf32>
    %38 = arith.truncf %37 : vector<8x32xf32> to vector<8x32xbf16>
    %39 = vector.extract_strided_slice %31 {offsets = [0, 0], sizes = [8, 8], strides = [1, 1]} : vector<8x32xf32> to vector<8x8xf32>
    %40 = arith.truncf %39 : vector<8x8xf32> to vector<8x8xbf16>
    %41 = vector.extract_strided_slice %34 {offsets = [0, 0], sizes = [8, 8], strides = [1, 1]} : vector<8x32xf32> to vector<8x8xf32>
    %42 = arith.truncf %41 : vector<8x8xf32> to vector<8x8xbf16>
    %43 = vector.extract_strided_slice %38 {offsets = [0, 0], sizes = [8, 8], strides = [1, 1]} : vector<8x32xbf16> to vector<8x8xbf16>
    %cst_24 = arith.constant dense<0.000000e+00> : vector<8x8xf32>
    %44 = tpu.matmul %40, %42, %cst_24 {dimension_numbers = #tpu.dot_dimension_numbers<[1], [1], [0], [0], [0, 0, 1, 0], [], []>} : vector<8x8xbf16>, vector<8x8xbf16>, vector<8x8xf32> -> vector<8x8xf32>
    %cst_25 = arith.constant dense<0xFF800000> : vector<8xf32>
    %45 = vector.multi_reduction <maximumf>, %44, %cst_25 [1] : vector<8x8xf32> to vector<8xf32>
    %46 = vector.shape_cast %45 : vector<8xf32> to vector<8x1xf32>
    %47 = vector.broadcast %46 : vector<8x1xf32> to vector<8x8xf32>
    %48 = arith.subf %44, %47 : vector<8x8xf32>
    %49 = math.exp %48 : vector<8x8xf32>
    %cst_26 = arith.constant dense<0.000000e+00> : vector<8xf32>
    %50 = vector.multi_reduction <add>, %49, %cst_26 [1] : vector<8x8xf32> to vector<8xf32>
    %51 = vector.shape_cast %50 : vector<8xf32> to vector<8x1xf32>
    %52 = tpu.reciprocal %51 {approx = true} : vector<8x1xf32> -> vector<8x1xf32>
    %53 = arith.truncf %49 : vector<8x8xf32> to vector<8x8xbf16>
    %cst_27 = arith.constant dense<0.000000e+00> : vector<8x8xf32>
    %54 = tpu.matmul %53, %43, %cst_27 {dimension_numbers = #tpu.dot_dimension_numbers<[1], [0], [0], [1], [0, 0, 1, 1], [], []>} : vector<8x8xbf16>, vector<8x8xbf16>, vector<8x8xf32> -> vector<8x8xf32>
    %55 = vector.broadcast %52 : vector<8x1xf32> to vector<8x8xf32>
    %56 = arith.mulf %55, %54 : vector<8x8xf32>
    %c0_28 = arith.constant 0 : index
    %c0_29 = arith.constant 0 : index
    %57 = vector.load %arg15[%c0_28, %c0_29] : memref<8x32xf32, #tpu.memory_space<vmem>>, vector<8x8xf32>
    tpu.vector_store %arg15[%c0_28, %c0_29], %56 {strides = array<i32>} : memref<8x32xf32, #tpu.memory_space<vmem>>, vector<8x8xf32>,
    %58 = vector.extract_strided_slice %31 {offsets = [0, 8], sizes = [8, 8], strides = [1, 1]} : vector<8x32xf32> to vector<8x8xf32>
    %59 = arith.truncf %58 : vector<8x8xf32> to vector<8x8xbf16>
    %60 = vector.extract_strided_slice %34 {offsets = [0, 8], sizes = [8, 8], strides = [1, 1]} : vector<8x32xf32> to vector<8x8xf32>
    %61 = arith.truncf %60 : vector<8x8xf32> to vector<8x8xbf16>
    %62 = vector.extract_strided_slice %38 {offsets = [0, 8], sizes = [8, 8], strides = [1, 1]} : vector<8x32xbf16> to vector<8x8xbf16>
    %cst_30 = arith.constant dense<0.000000e+00> : vector<8x8xf32>
    %63 = tpu.matmul %59, %61, %cst_30 {dimension_numbers = #tpu.dot_dimension_numbers<[1], [1], [0], [0], [0, 0, 1, 0], [], []>} : vector<8x8xbf16>, vector<8x8xbf16>, vector<8x8xf32> -> vector<8x8xf32>
    %cst_31 = arith.constant dense<0xFF800000> : vector<8xf32>
    %64 = vector.multi_reduction <maximumf>, %63, %cst_31 [1] : vector<8x8xf32> to vector<8xf32>
    %65 = vector.shape_cast %64 : vector<8xf32> to vector<8x1xf32>
    %66 = vector.broadcast %65 : vector<8x1xf32> to vector<8x8xf32>
    %67 = arith.subf %63, %66 : vector<8x8xf32>
    %68 = math.exp %67 : vector<8x8xf32>
    %cst_32 = arith.constant dense<0.000000e+00> : vector<8xf32>
    %69 = vector.multi_reduction <add>, %68, %cst_32 [1] : vector<8x8xf32> to vector<8xf32>
    %70 = vector.shape_cast %69 : vector<8xf32> to vector<8x1xf32>
    %71 = tpu.reciprocal %70 {approx = true} : vector<8x1xf32> -> vector<8x1xf32>
    %72 = arith.truncf %68 : vector<8x8xf32> to vector<8x8xbf16>
    %cst_33 = arith.constant dense<0.000000e+00> : vector<8x8xf32>
    %73 = tpu.matmul %72, %62, %cst_33 {dimension_numbers = #tpu.dot_dimension_numbers<[1], [0], [0], [1], [0, 0, 1, 1], [], []>} : vector<8x8xbf16>, vector<8x8xbf16>, vector<8x8xf32> -> vector<8x8xf32>
    %74 = vector.broadcast %71 : vector<8x1xf32> to vector<8x8xf32>
    %75 = arith.mulf %74, %73 : vector<8x8xf32>
    %c0_34 = arith.constant 0 : index
    %c8 = arith.constant 8 : index
    %76 = vector.load %arg15[%c0_34, %c8] : memref<8x32xf32, #tpu.memory_space<vmem>>, vector<8x8xf32>
    tpu.vector_store %arg15[%c0_34, %c8], %75 {strides = array<i32>} : memref<8x32xf32, #tpu.memory_space<vmem>>, vector<8x8xf32>,
    %77 = vector.extract_strided_slice %31 {offsets = [0, 16], sizes = [8, 8], strides = [1, 1]} : vector<8x32xf32> to vector<8x8xf32>
    %78 = arith.truncf %77 : vector<8x8xf32> to vector<8x8xbf16>
    %79 = vector.extract_strided_slice %34 {offsets = [0, 16], sizes = [8, 8], strides = [1, 1]} : vector<8x32xf32> to vector<8x8xf32>
    %80 = arith.truncf %79 : vector<8x8xf32> to vector<8x8xbf16>
    %81 = vector.extract_strided_slice %38 {offsets = [0, 16], sizes = [8, 8], strides = [1, 1]} : vector<8x32xbf16> to vector<8x8xbf16>
    %cst_35 = arith.constant dense<0.000000e+00> : vector<8x8xf32>
    %82 = tpu.matmul %78, %80, %cst_35 {dimension_numbers = #tpu.dot_dimension_numbers<[1], [1], [0], [0], [0, 0, 1, 0], [], []>} : vector<8x8xbf16>, vector<8x8xbf16>, vector<8x8xf32> -> vector<8x8xf32>
    %cst_36 = arith.constant dense<0xFF800000> : vector<8xf32>
    %83 = vector.multi_reduction <maximumf>, %82, %cst_36 [1] : vector<8x8xf32> to vector<8xf32>
    %84 = vector.shape_cast %83 : vector<8xf32> to vector<8x1xf32>
    %85 = vector.broadcast %84 : vector<8x1xf32> to vector<8x8xf32>
    %86 = arith.subf %82, %85 : vector<8x8xf32>
    %87 = math.exp %86 : vector<8x8xf32>
    %cst_37 = arith.constant dense<0.000000e+00> : vector<8xf32>
    %88 = vector.multi_reduction <add>, %87, %cst_37 [1] : vector<8x8xf32> to vector<8xf32>
    %89 = vector.shape_cast %88 : vector<8xf32> to vector<8x1xf32>
    %90 = tpu.reciprocal %89 {approx = true} : vector<8x1xf32> -> vector<8x1xf32>
    %91 = arith.truncf %87 : vector<8x8xf32> to vector<8x8xbf16>
    %cst_38 = arith.constant dense<0.000000e+00> : vector<8x8xf32>
    %92 = tpu.matmul %91, %81, %cst_38 {dimension_numbers = #tpu.dot_dimension_numbers<[1], [0], [0], [1], [0, 0, 1, 1], [], []>} : vector<8x8xbf16>, vector<8x8xbf16>, vector<8x8xf32> -> vector<8x8xf32>
    %93 = vector.broadcast %90 : vector<8x1xf32> to vector<8x8xf32>
    %94 = arith.mulf %93, %92 : vector<8x8xf32>
    %c0_39 = arith.constant 0 : index
    %c16 = arith.constant 16 : index
    %95 = vector.load %arg15[%c0_39, %c16] : memref<8x32xf32, #tpu.memory_space<vmem>>, vector<8x8xf32>
    tpu.vector_store %arg15[%c0_39, %c16], %94 {strides = array<i32>} : memref<8x32xf32, #tpu.memory_space<vmem>>, vector<8x8xf32>,
    %96 = vector.extract_strided_slice %31 {offsets = [0, 24], sizes = [8, 8], strides = [1, 1]} : vector<8x32xf32> to vector<8x8xf32>
    %97 = arith.truncf %96 : vector<8x8xf32> to vector<8x8xbf16>
    %98 = vector.extract_strided_slice %34 {offsets = [0, 24], sizes = [8, 8], strides = [1, 1]} : vector<8x32xf32> to vector<8x8xf32>
    %99 = arith.truncf %98 : vector<8x8xf32> to vector<8x8xbf16>
    %100 = vector.extract_strided_slice %38 {offsets = [0, 24], sizes = [8, 8], strides = [1, 1]} : vector<8x32xbf16> to vector<8x8xbf16>
    %cst_40 = arith.constant dense<0.000000e+00> : vector<8x8xf32>
    %101 = tpu.matmul %97, %99, %cst_40 {dimension_numbers = #tpu.dot_dimension_numbers<[1], [1], [0], [0], [0, 0, 1, 0], [], []>} : vector<8x8xbf16>, vector<8x8xbf16>, vector<8x8xf32> -> vector<8x8xf32>
    %cst_41 = arith.constant dense<0xFF800000> : vector<8xf32>
    %102 = vector.multi_reduction <maximumf>, %101, %cst_41 [1] : vector<8x8xf32> to vector<8xf32>
    %103 = vector.shape_cast %102 : vector<8xf32> to vector<8x1xf32>
    %104 = vector.broadcast %103 : vector<8x1xf32> to vector<8x8xf32>
    %105 = arith.subf %101, %104 : vector<8x8xf32>
    %106 = math.exp %105 : vector<8x8xf32>
    %cst_42 = arith.constant dense<0.000000e+00> : vector<8xf32>
    %107 = vector.multi_reduction <add>, %106, %cst_42 [1] : vector<8x8xf32> to vector<8xf32>
    %108 = vector.shape_cast %107 : vector<8xf32> to vector<8x1xf32>
    %109 = tpu.reciprocal %108 {approx = true} : vector<8x1xf32> -> vector<8x1xf32>
    %110 = arith.truncf %106 : vector<8x8xf32> to vector<8x8xbf16>
    %cst_43 = arith.constant dense<0.000000e+00> : vector<8x8xf32>
    %111 = tpu.matmul %110, %100, %cst_43 {dimension_numbers = #tpu.dot_dimension_numbers<[1], [0], [0], [1], [0, 0, 1, 1], [], []>} : vector<8x8xbf16>, vector<8x8xbf16>, vector<8x8xf32> -> vector<8x8xf32>
    %112 = vector.broadcast %109 : vector<8x1xf32> to vector<8x8xf32>
    %113 = arith.mulf %112, %111 : vector<8x8xf32>
    %c0_44 = arith.constant 0 : index
    %c24 = arith.constant 24 : index
    %114 = vector.load %arg15[%c0_44, %c24] : memref<8x32xf32, #tpu.memory_space<vmem>>, vector<8x8xf32>
    tpu.vector_store %arg15[%c0_44, %c24], %113 {strides = array<i32>} : memref<8x32xf32, #tpu.memory_space<vmem>>, vector<8x8xf32>,
    %c0_45 = arith.constant 0 : index
    %c0_46 = arith.constant 0 : index
    %115 = vector.load %arg15[%c0_45, %c0_46] : memref<8x32xf32, #tpu.memory_space<vmem>>, vector<8x32xf32>
    %116 = arith.truncf %115 : vector<8x32xf32> to vector<8x32xbf16>
    %c0_47 = arith.constant 0 : index
    %c0_48 = arith.constant 0 : index
    %c0_49 = arith.constant 0 : index
    %117 = vector.load %arg8[%c0_47, %c0_48, %c0_49] : memref<1x32x32xbf16, #tpu.memory_space<vmem>>, vector<1x32x32xbf16>
    %118 = vector.shape_cast %117 : vector<1x32x32xbf16> to vector<32x32xbf16>
    %cst_50 = arith.constant dense<0.000000e+00> : vector<8x32xf32>
    %119 = tpu.matmul %116, %118, %cst_50 {dimension_numbers = #tpu.dot_dimension_numbers<[1], [0], [0], [1], [0, 0, 1, 1], [], []>} : vector<8x32xbf16>, vector<32x32xbf16>, vector<8x32xf32> -> vector<8x32xf32>
    %120 = arith.addf %3, %119 : vector<8x32xf32>
    %cst_51 = arith.constant dense<0.000000e+00> : vector<8xf32>
    %121 = vector.multi_reduction <add>, %120, %cst_51 [1] : vector<8x32xf32> to vector<8xf32>
    %122 = vector.shape_cast %121 : vector<8xf32> to vector<8x1xf32>
    %cst_52 = arith.constant 3.200000e+01 : f32
    %123 = vector.broadcast %cst_52 : f32 to vector<8x1xf32>
    %124 = arith.divf %122, %123 : vector<8x1xf32>
    %125 = vector.broadcast %124 : vector<8x1xf32> to vector<8x32xf32>
    %126 = arith.subf %120, %125 : vector<8x32xf32>
    %127 = arith.mulf %126, %126 : vector<8x32xf32>
    %cst_53 = arith.constant dense<0.000000e+00> : vector<8xf32>
    %128 = vector.multi_reduction <add>, %127, %cst_53 [1] : vector<8x32xf32> to vector<8xf32>
    %129 = vector.shape_cast %128 : vector<8xf32> to vector<8x1xf32>
    %cst_54 = arith.constant 3.200000e+01 : f32
    %130 = vector.broadcast %cst_54 : f32 to vector<8x1xf32>
    %131 = arith.divf %129, %130 : vector<8x1xf32>
    %cst_55 = arith.constant 9.99999974E-6 : f32
    %132 = vector.broadcast %cst_55 : f32 to vector<8x1xf32>
    %133 = arith.addf %131, %132 : vector<8x1xf32>
    %134 = math.rsqrt %133 : vector<8x1xf32>
    %135 = vector.broadcast %134 : vector<8x1xf32> to vector<8x32xf32>
    %136 = arith.mulf %126, %135 : vector<8x32xf32>
    %137 = vector.broadcast %5 : vector<1x32xf32> to vector<8x32xf32>
    %138 = arith.mulf %136, %137 : vector<8x32xf32>
    %139 = vector.broadcast %7 : vector<1x32xf32> to vector<8x32xf32>
    %140 = arith.addf %138, %139 : vector<8x32xf32>
    %141 = arith.truncf %140 : vector<8x32xf32> to vector<8x32xbf16>
    %c0_56 = arith.constant 0 : index
    %c0_57 = arith.constant 0 : index
    %c0_58 = arith.constant 0 : index
    %142 = vector.load %arg9[%c0_56, %c0_57, %c0_58] : memref<1x32x64xbf16, #tpu.memory_space<vmem>>, vector<1x32x64xbf16>
    %143 = vector.shape_cast %142 : vector<1x32x64xbf16> to vector<32x64xbf16>
    %cst_59 = arith.constant dense<0.000000e+00> : vector<8x64xf32>
    %144 = tpu.matmul %141, %143, %cst_59 {dimension_numbers = #tpu.dot_dimension_numbers<[1], [0], [0], [1], [0, 0, 1, 1], [], []>} : vector<8x32xbf16>, vector<32x64xbf16>, vector<8x64xf32> -> vector<8x64xf32>
    %c0_60 = arith.constant 0 : index
    %c0_61 = arith.constant 0 : index
    %c0_62 = arith.constant 0 : index
    %145 = vector.load %arg10[%c0_60, %c0_61, %c0_62] : memref<1x1x64xf32, #tpu.memory_space<vmem>>, vector<1x1x64xf32>
    %146 = vector.shape_cast %145 : vector<1x1x64xf32> to vector<1x64xf32>
    %147 = vector.broadcast %146 : vector<1x64xf32> to vector<8x64xf32>
    %148 = arith.addf %144, %147 : vector<8x64xf32>
    %cst_63 = arith.constant 5.000000e-01 : f32
    %149 = vector.broadcast %cst_63 : f32 to vector<8x64xf32>
    %150 = arith.mulf %149, %148 : vector<8x64xf32>
    %cst_64 = arith.constant 4.471500e-02 : f32
    %151 = vector.broadcast %cst_64 : f32 to vector<8x64xf32>
    %152 = arith.mulf %151, %148 : vector<8x64xf32>
    %153 = arith.mulf %152, %148 : vector<8x64xf32>
    %154 = arith.mulf %153, %148 : vector<8x64xf32>
    %155 = arith.addf %148, %154 : vector<8x64xf32>
    %cst_65 = arith.constant 0.797884583 : f32
    %156 = vector.broadcast %cst_65 : f32 to vector<8x64xf32>
    %157 = arith.mulf %156, %155 : vector<8x64xf32>
    %158 = math.tanh %157 : vector<8x64xf32>
    %cst_66 = arith.constant 1.000000e+00 : f32
    %159 = vector.broadcast %cst_66 : f32 to vector<8x64xf32>
    %160 = arith.addf %159, %158 : vector<8x64xf32>
    %161 = arith.mulf %150, %160 : vector<8x64xf32>
    %162 = arith.truncf %161 : vector<8x64xf32> to vector<8x64xbf16>
    %c0_67 = arith.constant 0 : index
    %c0_68 = arith.constant 0 : index
    %c0_69 = arith.constant 0 : index
    %163 = vector.load %arg11[%c0_67, %c0_68, %c0_69] : memref<1x64x32xbf16, #tpu.memory_space<vmem>>, vector<1x64x32xbf16>
    %164 = vector.shape_cast %163 : vector<1x64x32xbf16> to vector<64x32xbf16>
    %cst_70 = arith.constant dense<0.000000e+00> : vector<8x32xf32>
    %165 = tpu.matmul %162, %164, %cst_70 {dimension_numbers = #tpu.dot_dimension_numbers<[1], [0], [0], [1], [0, 0, 1, 1], [], []>} : vector<8x64xbf16>, vector<64x32xbf16>, vector<8x32xf32> -> vector<8x32xf32>
    %c0_71 = arith.constant 0 : index
    %c0_72 = arith.constant 0 : index
    %c0_73 = arith.constant 0 : index
    %166 = vector.load %arg12[%c0_71, %c0_72, %c0_73] : memref<1x1x32xf32, #tpu.memory_space<vmem>>, vector<1x1x32xf32>
    %167 = vector.shape_cast %166 : vector<1x1x32xf32> to vector<1x32xf32>
    %168 = vector.broadcast %167 : vector<1x32xf32> to vector<8x32xf32>
    %169 = arith.addf %165, %168 : vector<8x32xf32>
    %170 = arith.addf %120, %169 : vector<8x32xf32>
    %c0_74 = arith.constant 0 : index
    %c0_75 = arith.constant 0 : index
    %171 = vector.load %arg14[%c0_74, %c0_75] : memref<8x32xf32, #tpu.memory_space<vmem>>, vector<8x32xf32>
    tpu.vector_store %arg14[%c0_74, %c0_75], %170 {strides = array<i32>} : memref<8x32xf32, #tpu.memory_space<vmem>>, vector<8x32xf32>,
    %c1_i32 = arith.constant 1 : i32
    %172 = arith.cmpi eq, %arg1, %c1_i32 : i32
    %173 = arith.extui %172 : i1 to i32
    %c0_i32_76 = arith.constant 0 : i32
    %174 = arith.cmpi ne, %173, %c0_i32_76 : i32
    scf.if %174 {
      %c0_77 = arith.constant 0 : index
      %c0_78 = arith.constant 0 : index
      %c0_79 = arith.constant 0 : index
      %175 = vector.load %arg13[%c0_77, %c0_78, %c0_79] : memref<1x8x32xf32, #tpu.memory_space<vmem>>, vector<1x8x32xf32>
      %176 = vector.shape_cast %175 : vector<1x8x32xf32> to vector<8x32xf32>
      %177 = vector.shape_cast %170 : vector<8x32xf32> to vector<1x8x32xf32>
      tpu.vector_store %arg13[%c0_77, %c0_78, %c0_79], %177 {strides = array<i32>} : memref<1x8x32xf32, #tpu.memory_space<vmem>>, vector<1x8x32xf32>,
    } else {
    }
    return
  }
  func.func @transform_0(%arg0: i32, %arg1: i32) -> (i32, i32, i32) {
    %c0_i32 = arith.constant 0 : i32
    %c0_i32_0 = arith.constant 0 : i32
    %c0_i32_1 = arith.constant 0 : i32
    return %arg0, %c0_i32, %c0_i32_0 : i32, i32, i32
  }
  func.func @transform_1(%arg0: i32, %arg1: i32) -> (i32, i32, i32) {
    %c0_i32 = arith.constant 0 : i32
    %c0_i32_0 = arith.constant 0 : i32
    %c0_i32_1 = arith.constant 0 : i32
    return %arg1, %c0_i32, %c0_i32_0 : i32, i32, i32
  }
  func.func @transform_2(%arg0: i32, %arg1: i32) -> (i32, i32, i32) {
    %c0_i32 = arith.constant 0 : i32
    %c0_i32_0 = arith.constant 0 : i32
    %c0_i32_1 = arith.constant 0 : i32
    return %arg1, %c0_i32, %c0_i32_0 : i32, i32, i32
  }
  func.func @transform_3(%arg0: i32, %arg1: i32) -> (i32, i32, i32) {
    %c0_i32 = arith.constant 0 : i32
    %c0_i32_0 = arith.constant 0 : i32
    %c0_i32_1 = arith.constant 0 : i32
    return %arg1, %c0_i32, %c0_i32_0 : i32, i32, i32
  }
  func.func @transform_4(%arg0: i32, %arg1: i32) -> (i32, i32, i32) {
    %c0_i32 = arith.constant 0 : i32
    %c0_i32_0 = arith.constant 0 : i32
    %c0_i32_1 = arith.constant 0 : i32
    return %arg1, %c0_i32, %c0_i32_0 : i32, i32, i32
  }
  func.func @transform_5(%arg0: i32, %arg1: i32) -> (i32, i32, i32) {
    %c0_i32 = arith.constant 0 : i32
    %c0_i32_0 = arith.constant 0 : i32
    %c0_i32_1 = arith.constant 0 : i32
    return %arg1, %c0_i32, %c0_i32_0 : i32, i32, i32
  }
  func.func @transform_6(%arg0: i32, %arg1: i32) -> (i32, i32, i32) {
    %c0_i32 = arith.constant 0 : i32
    %c0_i32_0 = arith.constant 0 : i32
    %c0_i32_1 = arith.constant 0 : i32
    return %arg1, %c0_i32, %c0_i32_0 : i32, i32, i32
  }
  func.func @transform_7(%arg0: i32, %arg1: i32) -> (i32, i32, i32) {
    %c0_i32 = arith.constant 0 : i32
    %c0_i32_0 = arith.constant 0 : i32
    %c0_i32_1 = arith.constant 0 : i32
    return %arg1, %c0_i32, %c0_i32_0 : i32, i32, i32
  }
  func.func @transform_8(%arg0: i32, %arg1: i32) -> (i32, i32, i32) {
    %c0_i32 = arith.constant 0 : i32
    %c0_i32_0 = arith.constant 0 : i32
    %c0_i32_1 = arith.constant 0 : i32
    return %arg1, %c0_i32, %c0_i32_0 : i32, i32, i32
  }
  func.func @transform_9(%arg0: i32, %arg1: i32) -> (i32, i32, i32) {
    %c0_i32 = arith.constant 0 : i32
    %c0_i32_0 = arith.constant 0 : i32
    %c0_i32_1 = arith.constant 0 : i32
    return %arg1, %c0_i32, %c0_i32_0 : i32, i32, i32
  }
  func.func @transform_10(%arg0: i32, %arg1: i32) -> (i32, i32, i32) {
    %c0_i32 = arith.constant 0 : i32
    %c0_i32_0 = arith.constant 0 : i32
    %c0_i32_1 = arith.constant 0 : i32
    return %arg1, %c0_i32, %c0_i32_0 : i32, i32, i32
  }
  func.func @transform_11(%arg0: i32, %arg1: i32) -> (i32, i32, i32) {
    %c0_i32 = arith.constant 0 : i32
    %c0_i32_0 = arith.constant 0 : i32
    %c0_i32_1 = arith.constant 0 : i32
    return %arg0, %c0_i32, %c0_i32_0 : i32, i32, i32
  }
}

</mosaic_0001>

<llo_original>
// kernel: tpu_custom_call.1
$region0: #{tpu_custom_call.1}
  #allocation0 [shape = 'u32[]', space=smem, size = 0x4, offset = 0x4, fixed_abs, tag = 'smem constant byte address 0x4 - core index']
  #allocation1 [shape = 'u32[144,128]{1,0:T(1,128)}', space=vmem, size = 0x12000, scoped, tag = 'internal scratch']
  #allocation2 [shape = 'f32[8,32]{1,0:T(8,128)}', space=vmem, size = 0x1000, scoped, tag = 'scratch operand']
  #allocation3 [shape = 'f32[8,32]{1,0:T(8,128)}', space=vmem, size = 0x1000, scoped, tag = 'scratch operand']
  %s0 = inlined_call_operand.hbm [shape: f32[2,8,32], index: 0, kind: input, shape index: {}]
  %s1 = inlined_call_operand.vmem [shape: f32[2,1,32], index: 1, kind: input, shape index: {}]
  %s2 = inlined_call_operand.hbm [shape: f32[2,1,32], index: 2, kind: input, shape index: {}]
  %s3 = inlined_call_operand.vmem [shape: bf16[2,32,32], index: 3, kind: input, shape index: {}]
  %s4 = inlined_call_operand.vmem [shape: bf16[2,32,32], index: 4, kind: input, shape index: {}]
  %s5 = inlined_call_operand.vmem [shape: bf16[2,32,32], index: 5, kind: input, shape index: {}]
  %s6 = inlined_call_operand.hbm [shape: bf16[2,32,32], index: 6, kind: input, shape index: {}]
  %s7 = inlined_call_operand.hbm [shape: bf16[2,32,64], index: 7, kind: input, shape index: {}]
  %s8 = inlined_call_operand.hbm [shape: f32[2,1,64], index: 8, kind: input, shape index: {}]
  %s9 = inlined_call_operand.vmem [shape: bf16[2,64,32], index: 9, kind: input, shape index: {}]
  %s10 = inlined_call_operand.vmem [shape: f32[2,1,32], index: 10, kind: input, shape index: {}]
  %s11 = inlined_call_operand.hbm [shape: f32[2,8,32], index: 11, kind: output, shape index: {}]
  %s12 = sld [smem:[#allocation0]]
  $region105: #{tpu_custom_call.1} parent=0
    _
  %s14 = ssub.s32 1, %s12
  %s15 = scalar_select 0, %s14, %s12
  $region1: #{tpu_custom_call.1} parent=0
    #allocation4 [shape = 'u8[8192]{0}', space=vmem, size = 0x2000, scoped, tag = 'input window, operand 0']
    #allocation5 [shape = 's32[2]{0}', space=sflag, size = 0x8, scoped, tag = 'scoped memory for tpu_custom_call.1']
    #allocation6 [shape = 's32[2]{0}', space=sflag, size = 0x8, scoped, tag = 'scoped memory for tpu_custom_call.1']
    #allocation7 [shape = 'u8[1024]{0}', space=vmem, size = 0x400, scoped, tag = 'input window, operand 2']
    #allocation8 [shape = 's32[2]{0}', space=sflag, size = 0x8, scoped, tag = 'scoped memory for tpu_custom_call.1']
    #allocation9 [shape = 'u8[16384]{0}', space=vmem, size = 0x4000, scoped, tag = 'input window, operand 6']
    #allocation10 [shape = 'u8[16384]{0}', space=vmem, size = 0x4000, scoped, tag = 'input window, operand 7']
    #allocation11 [shape = 's32[2]{0}', space=sflag, size = 0x8, scoped, tag = 'scoped memory for tpu_custom_call.1']
    #allocation12 [shape = 'u8[1024]{0}', space=vmem, size = 0x400, scoped, tag = 'input window, operand 8']
    #allocation13 [shape = 'u8[8192]{0}', space=vmem, size = 0x2000, scoped, tag = 'output window, operand 0']
    %16 = vsyncpa [#allocation5], 0
    %s17 = scalar_lea.sflag [#allocation5], 1
    %18 = vsyncpa %s17, 0
    %19 = vsyncpa [#allocation8], 0
    %s20 = scalar_lea.sflag [#allocation8], 1
    %21 = vsyncpa %s20, 0
    %22 = vsyncpa [#allocation11], 0
    %s23 = scalar_lea.sflag [#allocation11], 1
    %24 = vsyncpa %s23, 0
    %25 = vsyncpa [#allocation6], 0
    %s26 = scalar_lea.sflag [#allocation6], 1
    %27 = vsyncpa %s26, 0
    loop: start=0, step=1, limit=6
    $region2: #{tpu_custom_call.1} parent=1 // loop_pre_header
      _
    $region3: #{tpu_custom_call.1} parent=1 // loop_header
      %s29 = sphi 0, %s33
      %p30 = scmp.ge.s32.totalorder %s29, 6
      %s36 = sphi 0, %s48
      %s37 = sphi 0, %s44
      %s38 = sphi 0, %s36
      %s39 = sphi 0, %s37
      %s40 = sphi 0, %s38
      %s41 = sphi 0, %s39
      %s51 = sphi 0, %s53
      %s54 = sphi 0, %s51
      %s55 = sphi 0, %s54
      %s71 = sphi 0, %s55
      %s77 = sphi 0, %s79
      %s80 = sphi 0, %s77
      %s81 = sphi 0, %s80
      %s97 = sphi 0, %s81
      %s103 = sphi 0, %s105
      %s106 = sphi 0, %s103
      %s107 = sphi 0, %s106
      %s123 = sphi 0, %s107
      %s129 = sphi 0, %s131
      %s132 = sphi 0, %s129
      %s133 = sphi 0, %s132
      %s149 = sphi 0, %s133
      %s155 = sphi 0, %s157
      %s158 = sphi 0, %s155
      %s159 = sphi 0, %s158
      %s175 = sphi 0, %s159
      %s181 = sphi 0, %s183
      %s184 = sphi 0, %s181
      %s185 = sphi 0, %s184
      %s201 = sphi 0, %s185
      %s207 = sphi 0, %s209
      %s210 = sphi 0, %s207
      %s211 = sphi 0, %s210
      %s227 = sphi 0, %s211
      %s233 = sphi 0, %s235
      %s236 = sphi 0, %s233
      %s237 = sphi 0, %s236
      %s253 = sphi 0, %s237
      %s259 = sphi 0, %s261
      %s262 = sphi 0, %s259
      %s263 = sphi 0, %s262
      %s279 = sphi 0, %s263
      %s285 = sphi 0, %s287
      %s288 = sphi 0, %s285
      %s289 = sphi 0, %s288
      %s305 = sphi 0, %s289
      %s311 = sphi 0, %s313
      %s314 = sphi 0, %s311
      %s315 = sphi 0, %s314
      %s331 = sphi 0, %s315
      %s337 = sphi 0, %s339
      %s340 = sphi 0, %s337
      %s341 = sphi 0, %s340
      %s357 = sphi 0, %s341
    $region4: #{tpu_custom_call.1} parent=1 // loop_header_branch
      %32 = sbr.rel (%p30) target = $region8
    $region5: #{tpu_custom_call.1} parent=1 // loop_body
      %s34 = ssub.s32 %s29, 1
      %s35 = ssub.s32 %s29, 2
      %s42 = sadd.s32 1, %s37
      %p43 = scmp.ge.s32.totalorder %s42, 2
      %s44 = scalar_select %p43, 0, %s42
      %s45 = sadd.s32 1, %s36
      %s46 = scalar_select %p43, %s45, %s36
      %p47 = scmp.ge.s32.totalorder %s46, 2
      %s48 = scalar_select %p47, 0, %s46
      %s49 = ssub.s32 %s36, %s48
      %p50 = scmp.eq.s32.totalorder %s49, 0
      %s52 = sadd.s32 %s51, 1
      %s53 = scalar_select %p50, %s51, %s52
      %p56 = pneg %p50
      %p57 = scmp.eq.s32.totalorder %s29, 3
      %p58 = por %p56, %p57
      %p59 = scmp.ne.s32.totalorder %s51, %s54
      %p60 = scmp.eq.s32.totalorder %s29, 0
      %p61 = por %p59, %p60
      %p62 = scmp.ne.s32.totalorder %s51, %s54
      %p63 = scmp.eq.s32.totalorder %s34, 3
      %p64 = por %p62, %p63
      %p65 = scmp.ne.s32.totalorder %s54, %s55
      %p66 = scmp.eq.s32.totalorder %s34, 0
      %p67 = por %p65, %p66
      %p68 = scmp.ne.s32.totalorder %s54, %s55
      %p69 = scmp.eq.s32.totalorder %s35, 3
      %p70 = por %p68, %p69
      %p72 = scmp.ne.s32.totalorder %s55, %s71
      %p73 = scmp.eq.s32.totalorder %s35, 0
      %p74 = por %p72, %p73
      %s75 = ssub.s32 %s37, %s44
      %p76 = scmp.eq.s32.totalorder %s75, 0
      %s78 = sadd.s32 %s77, 1
      %s79 = scalar_select %p76, %s77, %s78
      %p82 = pneg %p76
      %p83 = scmp.eq.s32.totalorder %s29, 3
      %p84 = por %p82, %p83
      %p85 = scmp.ne.s32.totalorder %s77, %s80
      %p86 = scmp.eq.s32.totalorder %s29, 0
      %p87 = por %p85, %p86
      %p88 = scmp.ne.s32.totalorder %s77, %s80
      %p89 = scmp.eq.s32.totalorder %s34, 3
      %p90 = por %p88, %p89
      %p91 = scmp.ne.s32.totalorder %s80, %s81
      %p92 = scmp.eq.s32.totalorder %s34, 0
      %p93 = por %p91, %p92
      %p94 = scmp.ne.s32.totalorder %s80, %s81
      %p95 = scmp.eq.s32.totalorder %s35, 3
      %p96 = por %p94, %p95
      %p98 = scmp.ne.s32.totalorder %s81, %s97
      %p99 = scmp.eq.s32.totalorder %s35, 0
      %p100 = por %p98, %p99
      %s101 = ssub.s32 %s37, %s44
      %p102 = scmp.eq.s32.totalorder %s101, 0
      %s104 = sadd.s32 %s103, 1
      %s105 = scalar_select %p102, %s103, %s104
      %p108 = pneg %p102
      %p109 = scmp.eq.s32.totalorder %s29, 3
      %p110 = por %p108, %p109
      %p111 = scmp.ne.s32.totalorder %s103, %s106
      %p112 = scmp.eq.s32.totalorder %s29, 0
      %p113 = por %p111, %p112
      %p114 = scmp.ne.s32.totalorder %s103, %s106
      %p115 = scmp.eq.s32.totalorder %s34, 3
      %p116 = por %p114, %p115
      %p117 = scmp.ne.s32.totalorder %s106, %s107
      %p118 = scmp.eq.s32.totalorder %s34, 0
      %p119 = por %p117, %p118
      %p120 = scmp.ne.s32.totalorder %s106, %s107
      %p121 = scmp.eq.s32.totalorder %s35, 3
      %p122 = por %p120, %p121
      %p124 = scmp.ne.s32.totalorder %s107, %s123
      %p125 = scmp.eq.s32.totalorder %s35, 0
      %p126 = por %p124, %p125
      %s127 = ssub.s32 %s37, %s44
      %p128 = scmp.eq.s32.totalorder %s127, 0
      %s130 = sadd.s32 %s129, 1
      %s131 = scalar_select %p128, %s129, %s130
      %p134 = pneg %p128
      %p135 = scmp.eq.s32.totalorder %s29, 3
      %p136 = por %p134, %p135
      %p137 = scmp.ne.s32.totalorder %s129, %s132
      %p138 = scmp.eq.s32.totalorder %s29, 0
      %p139 = por %p137, %p138
      %p140 = scmp.ne.s32.totalorder %s129, %s132
      %p141 = scmp.eq.s32.totalorder %s34, 3
      %p142 = por %p140, %p141
      %p143 = scmp.ne.s32.totalorder %s132, %s133
      %p144 = scmp.eq.s32.totalorder %s34, 0
      %p145 = por %p143, %p144
      %p146 = scmp.ne.s32.totalorder %s132, %s133
      %p147 = scmp.eq.s32.totalorder %s35, 3
      %p148 = por %p146, %p147
      %p150 = scmp.ne.s32.totalorder %s133, %s149
      %p151 = scmp.eq.s32.totalorder %s35, 0
      %p152 = por %p150, %p151
      %s153 = ssub.s32 %s37, %s44
      %p154 = scmp.eq.s32.totalorder %s153, 0
      %s156 = sadd.s32 %s155, 1
      %s157 = scalar_select %p154, %s155, %s156
      %p160 = pneg %p154
      %p161 = scmp.eq.s32.totalorder %s29, 3
      %p162 = por %p160, %p161
      %p163 = scmp.ne.s32.totalorder %s155, %s158
      %p164 = scmp.eq.s32.totalorder %s29, 0
      %p165 = por %p163, %p164
      %p166 = scmp.ne.s32.totalorder %s155, %s158
      %p167 = scmp.eq.s32.totalorder %s34, 3
      %p168 = por %p166, %p167
      %p169 = scmp.ne.s32.totalorder %s158, %s159
      %p170 = scmp.eq.s32.totalorder %s34, 0
      %p171 = por %p169, %p170
      %p172 = scmp.ne.s32.totalorder %s158, %s159
      %p173 = scmp.eq.s32.totalorder %s35, 3
      %p174 = por %p172, %p173
      %p176 = scmp.ne.s32.totalorder %s159, %s175
      %p177 = scmp.eq.s32.totalorder %s35, 0
      %p178 = por %p176, %p177
      %s179 = ssub.s32 %s37, %s44
      %p180 = scmp.eq.s32.totalorder %s179, 0
      %s182 = sadd.s32 %s181, 1
      %s183 = scalar_select %p180, %s181, %s182
      %p186 = pneg %p180
      %p187 = scmp.eq.s32.totalorder %s29, 3
      %p188 = por %p186, %p187
      %p189 = scmp.ne.s32.totalorder %s181, %s184
      %p190 = scmp.eq.s32.totalorder %s29, 0
      %p191 = por %p189, %p190
      %p192 = scmp.ne.s32.totalorder %s181, %s184
      %p193 = scmp.eq.s32.totalorder %s34, 3
      %p194 = por %p192, %p193
      %p195 = scmp.ne.s32.totalorder %s184, %s185
      %p196 = scmp.eq.s32.totalorder %s34, 0
      %p197 = por %p195, %p196
      %p198 = scmp.ne.s32.totalorder %s184, %s185
      %p199 = scmp.eq.s32.totalorder %s35, 3
      %p200 = por %p198, %p199
      %p202 = scmp.ne.s32.totalorder %s185, %s201
      %p203 = scmp.eq.s32.totalorder %s35, 0
      %p204 = por %p202, %p203
      %s205 = ssub.s32 %s37, %s44
      %p206 = scmp.eq.s32.totalorder %s205, 0
      %s208 = sadd.s32 %s207, 1
      %s209 = scalar_select %p206, %s207, %s208
      %p212 = pneg %p206
      %p213 = scmp.eq.s32.totalorder %s29, 3
      %p214 = por %p212, %p213
      %p215 = scmp.ne.s32.totalorder %s207, %s210
      %p216 = scmp.eq.s32.totalorder %s29, 0
      %p217 = por %p215, %p216
      %p218 = scmp.ne.s32.totalorder %s207, %s210
      %p219 = scmp.eq.s32.totalorder %s34, 3
      %p220 = por %p218, %p219
      %p221 = scmp.ne.s32.totalorder %s210, %s211
      %p222 = scmp.eq.s32.totalorder %s34, 0
      %p223 = por %p221, %p222
      %p224 = scmp.ne.s32.totalorder %s210, %s211
      %p225 = scmp.eq.s32.totalorder %s35, 3
      %p226 = por %p224, %p225
      %p228 = scmp.ne.s32.totalorder %s211, %s227
      %p229 = scmp.eq.s32.totalorder %s35, 0
      %p230 = por %p228, %p229
      %s231 = ssub.s32 %s37, %s44
      %p232 = scmp.eq.s32.totalorder %s231, 0
      %s234 = sadd.s32 %s233, 1
      %s235 = scalar_select %p232, %s233, %s234
      %p238 = pneg %p232
      %p239 = scmp.eq.s32.totalorder %s29, 3
      %p240 = por %p238, %p239
      %p241 = scmp.ne.s32.totalorder %s233, %s236
      %p242 = scmp.eq.s32.totalorder %s29, 0
      %p243 = por %p241, %p242
      %p244 = scmp.ne.s32.totalorder %s233, %s236
      %p245 = scmp.eq.s32.totalorder %s34, 3
      %p246 = por %p244, %p245
      %p247 = scmp.ne.s32.totalorder %s236, %s237
      %p248 = scmp.eq.s32.totalorder %s34, 0
      %p249 = por %p247, %p248
      %p250 = scmp.ne.s32.totalorder %s236, %s237
      %p251 = scmp.eq.s32.totalorder %s35, 3
      %p252 = por %p250, %p251
      %p254 = scmp.ne.s32.totalorder %s237, %s253
      %p255 = scmp.eq.s32.totalorder %s35, 0
      %p256 = por %p254, %p255
      %s257 = ssub.s32 %s37, %s44
      %p258 = scmp.eq.s32.totalorder %s257, 0
      %s260 = sadd.s32 %s259, 1
      %s261 = scalar_select %p258, %s259, %s260
      %p264 = pneg %p258
      %p265 = scmp.eq.s32.totalorder %s29, 3
      %p266 = por %p264, %p265
      %p267 = scmp.ne.s32.totalorder %s259, %s262
      %p268 = scmp.eq.s32.totalorder %s29, 0
      %p269 = por %p267, %p268
      %p270 = scmp.ne.s32.totalorder %s259, %s262
      %p271 = scmp.eq.s32.totalorder %s34, 3
      %p272 = por %p270, %p271
      %p273 = scmp.ne.s32.totalorder %s262, %s263
      %p274 = scmp.eq.s32.totalorder %s34, 0
      %p275 = por %p273, %p274
      %p276 = scmp.ne.s32.totalorder %s262, %s263
      %p277 = scmp.eq.s32.totalorder %s35, 3
      %p278 = por %p276, %p277
      %p280 = scmp.ne.s32.totalorder %s263, %s279
      %p281 = scmp.eq.s32.totalorder %s35, 0
      %p282 = por %p280, %p281
      %s283 = ssub.s32 %s37, %s44
      %p284 = scmp.eq.s32.totalorder %s283, 0
      %s286 = sadd.s32 %s285, 1
      %s287 = scalar_select %p284, %s285, %s286
      %p290 = pneg %p284
      %p291 = scmp.eq.s32.totalorder %s29, 3
      %p292 = por %p290, %p291
      %p293 = scmp.ne.s32.totalorder %s285, %s288
      %p294 = scmp.eq.s32.totalorder %s29, 0
      %p295 = por %p293, %p294
      %p296 = scmp.ne.s32.totalorder %s285, %s288
      %p297 = scmp.eq.s32.totalorder %s34, 3
      %p298 = por %p296, %p297
      %p299 = scmp.ne.s32.totalorder %s288, %s289
      %p300 = scmp.eq.s32.totalorder %s34, 0
      %p301 = por %p299, %p300
      %p302 = scmp.ne.s32.totalorder %s288, %s289
      %p303 = scmp.eq.s32.totalorder %s35, 3
      %p304 = por %p302, %p303
      %p306 = scmp.ne.s32.totalorder %s289, %s305
      %p307 = scmp.eq.s32.totalorder %s35, 0
      %p308 = por %p306, %p307
      %s309 = ssub.s32 %s37, %s44
      %p310 = scmp.eq.s32.totalorder %s309, 0
      %s312 = sadd.s32 %s311, 1
      %s313 = scalar_select %p310, %s311, %s312
      %p316 = pneg %p310
      %p317 = scmp.eq.s32.totalorder %s29, 3
      %p318 = por %p316, %p317
      %p319 = scmp.ne.s32.totalorder %s311, %s314
      %p320 = scmp.eq.s32.totalorder %s29, 0
      %p321 = por %p319, %p320
      %p322 = scmp.ne.s32.totalorder %s311, %s314
      %p323 = scmp.eq.s32.totalorder %s34, 3
      %p324 = por %p322, %p323
      %p325 = scmp.ne.s32.totalorder %s314, %s315
      %p326 = scmp.eq.s32.totalorder %s34, 0
      %p327 = por %p325, %p326
      %p328 = scmp.ne.s32.totalorder %s314, %s315
      %p329 = scmp.eq.s32.totalorder %s35, 3
      %p330 = por %p328, %p329
      %p332 = scmp.ne.s32.totalorder %s315, %s331
      %p333 = scmp.eq.s32.totalorder %s35, 0
      %p334 = por %p332, %p333
      %s335 = ssub.s32 %s36, %s48
      %p336 = scmp.eq.s32.totalorder %s335, 0
      %s338 = sadd.s32 %s337, 1
      %s339 = scalar_select %p336, %s337, %s338
      %p342 = pneg %p336
      %p343 = scmp.eq.s32.totalorder %s29, 3
      %p344 = por %p342, %p343
      %p345 = scmp.ne.s32.totalorder %s337, %s340
      %p346 = scmp.eq.s32.totalorder %s29, 0
      %p347 = por %p345, %p346
      %p348 = scmp.ne.s32.totalorder %s337, %s340
      %p349 = scmp.eq.s32.totalorder %s34, 3
      %p350 = por %p348, %p349
      %p351 = scmp.ne.s32.totalorder %s340, %s341
      %p352 = scmp.eq.s32.totalorder %s34, 0
      %p353 = por %p351, %p352
      %p354 = scmp.ne.s32.totalorder %s340, %s341
      %p355 = scmp.eq.s32.totalorder %s35, 3
      %p356 = por %p354, %p355
      %p358 = scmp.ne.s32.totalorder %s341, %s357
      %p359 = scmp.eq.s32.totalorder %s35, 0
      %p360 = por %p358, %p359
      %p361 = scmp.le.s32.totalorder 1, %s29
      %p362 = scmp.lt.s32.totalorder %s29, 5
      %p363 = pnand %p361, %p362
      %p364 = pneg %p363
      // Predicated region
      $region9: #{tpu_custom_call.1} parent=5 // pred_check
        _
      $region10: #{tpu_custom_call.1} parent=5 // pred_check_branch
        %366 = sbr.rel (%p363) target = $region12
      $region11: #{tpu_custom_call.1} parent=5 // pred_region
        %s367 = ssub.s32 %s29, 1
      $region12: #{tpu_custom_call.1} parent=5 // pred_fallthru
        _
      %p368 = scmp.lt.s32.totalorder %s29, 4
      // Predicated region
      $region13: #{tpu_custom_call.1} parent=5 // pred_check
        %p369 = pneg %p368
      $region14: #{tpu_custom_call.1} parent=5 // pred_check_branch
        %371 = sbr.rel (%p369) target = $region16
      $region15: #{tpu_custom_call.1} parent=5 // pred_region
        // Predicated region
        $region17: #{tpu_custom_call.1} parent=15 // pred_check
          %p372 = pneg %p61
        $region18: #{tpu_custom_call.1} parent=15 // pred_check_branch
          %374 = sbr.rel (%p372) target = $region20
        $region19: #{tpu_custom_call.1} parent=15 // pred_region
          %s375 = sand.u32 %s51, 1
          %s376 = scalar_lea.sflag [#allocation5], %s375
          %s377 = sand.u32 %s51, 1
          %s378 = smul.addr %s377, 8
          %s379 = scalar_lea.vmem [#allocation4], %s378
          %s381 = ssub.s32 128, 128
          %382 = vsyncadd %s376, %s381
          %s383 = smul.addr %s36, 128
          %s384 = scalar_lea.hbm %s0, %s383
          %s386 = sshll.u32 %s379, 4
          %s387 = int_to_ptr.vmem [resolvable:$true] %s386
          %389 = dma.hbm_to_vmem [thread:$0]  %s384, 128, %s387, %s376
        $region20: #{tpu_custom_call.1} parent=15 // pred_fallthru
          _
        // Predicated region
        $region21: #{tpu_custom_call.1} parent=15 // pred_check
          %p390 = pneg %p87
        $region22: #{tpu_custom_call.1} parent=15 // pred_check_branch
          %392 = sbr.rel (%p390) target = $region24
        $region23: #{tpu_custom_call.1} parent=15 // pred_region
          %p393 = scmp.lt.s32.totalorder %s37, 1
          %s394 = scalar_select %p393, %s37, 1
          %s395 = scalar_lea.vmem %s1, %s394
        $region24: #{tpu_custom_call.1} parent=15 // pred_fallthru
          _
        // Predicated region
        $region25: #{tpu_custom_call.1} parent=15 // pred_check
          %p396 = pneg %p113
        $region26: #{tpu_custom_call.1} parent=15 // pred_check_branch
          %398 = sbr.rel (%p396) target = $region28
        $region27: #{tpu_custom_call.1} parent=15 // pred_region
          %s399 = sand.u32 %s29, 1
          %s400 = scalar_lea.sflag [#allocation8], %s399
          %s401 = sand.u32 %s103, 1
          %s402 = scalar_lea.vmem [#allocation7], %s401
          %s404 = ssub.s32 16, 16
          %405 = vsyncadd %s400, %s404
          %s406 = smul.addr %s37, 16
          %s407 = scalar_lea.hbm %s2, %s406
          %s409 = sshll.u32 %s402, 4
          %s410 = int_to_ptr.vmem [resolvable:$true] %s409
          %412 = dma.hbm_to_vmem [thread:$0]  %s407, 16, %s410, %s400
        $region28: #{tpu_custom_call.1} parent=15 // pred_fallthru
          _
        // Predicated region
        $region29: #{tpu_custom_call.1} parent=15 // pred_check
          %p413 = pneg %p139
        $region30: #{tpu_custom_call.1} parent=15 // pred_check_branch
          %415 = sbr.rel (%p413) target = $region32
        $region31: #{tpu_custom_call.1} parent=15 // pred_region
          %p416 = scmp.lt.s32.totalorder %s37, 1
          %s417 = scalar_select %p416, %s37, 1
          %s418 = smul.addr %s417, 4
          %s419 = smul.addr %s418, 4
          %s420 = scalar_lea.vmem %s3, %s419
        $region32: #{tpu_custom_call.1} parent=15 // pred_fallthru
          _
        // Predicated region
        $region33: #{tpu_custom_call.1} parent=15 // pred_check
          %p421 = pneg %p165
        $region34: #{tpu_custom_call.1} parent=15 // pred_check_branch
          %423 = sbr.rel (%p421) target = $region36
        $region35: #{tpu_custom_call.1} parent=15 // pred_region
          %p424 = scmp.lt.s32.totalorder %s37, 1
          %s425 = scalar_select %p424, %s37, 1
          %s426 = smul.addr %s425, 4
          %s427 = smul.addr %s426, 4
          %s428 = scalar_lea.vmem %s4, %s427
        $region36: #{tpu_custom_call.1} parent=15 // pred_fallthru
          _
        // Predicated region
        $region37: #{tpu_custom_call.1} parent=15 // pred_check
          %p429 = pneg %p191
        $region38: #{tpu_custom_call.1} parent=15 // pred_check_branch
          %431 = sbr.rel (%p429) target = $region40
        $region39: #{tpu_custom_call.1} parent=15 // pred_region
          %p432 = scmp.lt.s32.totalorder %s37, 1
          %s433 = scalar_select %p432, %s37, 1
          %s434 = smul.addr %s433, 4
          %s435 = smul.addr %s434, 4
          %s436 = scalar_lea.vmem %s5, %s435
        $region40: #{tpu_custom_call.1} parent=15 // pred_fallthru
          _
        // Predicated region
        $region41: #{tpu_custom_call.1} parent=15 // pred_check
          %p437 = pneg %p217
        $region42: #{tpu_custom_call.1} parent=15 // pred_check_branch
          %439 = sbr.rel (%p437) target = $region44
        $region43: #{tpu_custom_call.1} parent=15 // pred_region
          %s440 = sand.u32 %s29, 1
          %s441 = scalar_lea.sflag [#allocation8], %s440
          %s442 = sand.u32 %s207, 1
          %s443 = smul.addr %s442, 16
          %s444 = scalar_lea.vmem [#allocation9], %s443
          %s446 = ssub.s32 256, 256
          %447 = vsyncadd %s441, %s446
          %s448 = smul.addr %s37, 4
          %s449 = smul.addr %s448, 64
          %s450 = scalar_lea.hbm %s6, %s449
          %s451 = sshll.u32 %s444, 4
          %s452 = int_to_ptr.vmem [resolvable:$true] %s451
          %457 = dma.hbm_to_vmem [thread:$0]  %s450, 256, %s452, %s441, 64, 64, 4
        $region44: #{tpu_custom_call.1} parent=15 // pred_fallthru
          _
        // Predicated region
        $region45: #{tpu_custom_call.1} parent=15 // pred_check
          %p458 = pneg %p243
        $region46: #{tpu_custom_call.1} parent=15 // pred_check_branch
          %460 = sbr.rel (%p458) target = $region48
        $region47: #{tpu_custom_call.1} parent=15 // pred_region
          %s461 = sand.u32 %s29, 1
          %s462 = scalar_lea.sflag [#allocation11], %s461
          %s463 = sand.u32 %s233, 1
          %s464 = smul.addr %s463, 16
          %s465 = scalar_lea.vmem [#allocation10], %s464
          %s467 = ssub.s32 256, 256
          %468 = vsyncadd %s462, %s467
          %s469 = smul.addr %s37, 4
          %s470 = smul.addr %s469, 64
          %s471 = scalar_lea.hbm %s7, %s470
          %s472 = sshll.u32 %s465, 4
          %s473 = int_to_ptr.vmem [resolvable:$true] %s472
          %478 = dma.hbm_to_vmem [thread:$0]  %s471, 256, %s473, %s462, 64, 64, 4
        $region48: #{tpu_custom_call.1} parent=15 // pred_fallthru
          _
        // Predicated region
        $region49: #{tpu_custom_call.1} parent=15 // pred_check
          %p479 = pneg %p269
        $region50: #{tpu_custom_call.1} parent=15 // pred_check_branch
          %481 = sbr.rel (%p479) target = $region52
        $region51: #{tpu_custom_call.1} parent=15 // pred_region
          %s482 = sand.u32 %s29, 1
          %s483 = scalar_lea.sflag [#allocation11], %s482
          %s484 = sand.u32 %s259, 1
          %s485 = scalar_lea.vmem [#allocation12], %s484
          %s487 = ssub.s32 16, 16
          %488 = vsyncadd %s483, %s487
          %s489 = smul.addr %s37, 16
          %s490 = scalar_lea.hbm %s8, %s489
          %s492 = sshll.u32 %s485, 4
          %s493 = int_to_ptr.vmem [resolvable:$true] %s492
          %495 = dma.hbm_to_vmem [thread:$0]  %s490, 16, %s493, %s483
        $region52: #{tpu_custom_call.1} parent=15 // pred_fallthru
          _
        // Predicated region
        $region53: #{tpu_custom_call.1} parent=15 // pred_check
          %p496 = pneg %p295
        $region54: #{tpu_custom_call.1} parent=15 // pred_check_branch
          %498 = sbr.rel (%p496) target = $region56
        $region55: #{tpu_custom_call.1} parent=15 // pred_region
          %p499 = scmp.lt.s32.totalorder %s37, 1
          %s500 = scalar_select %p499, %s37, 1
          %s501 = smul.addr %s500, 8
          %s502 = smul.addr %s501, 4
          %s503 = scalar_lea.vmem %s9, %s502
        $region56: #{tpu_custom_call.1} parent=15 // pred_fallthru
          _
        // Predicated region
        $region57: #{tpu_custom_call.1} parent=15 // pred_check
          %p504 = pneg %p321
        $region58: #{tpu_custom_call.1} parent=15 // pred_check_branch
          %506 = sbr.rel (%p504) target = $region60
        $region59: #{tpu_custom_call.1} parent=15 // pred_region
          %p507 = scmp.lt.s32.totalorder %s37, 1
          %s508 = scalar_select %p507, %s37, 1
          %s509 = scalar_lea.vmem %s10, %s508
        $region60: #{tpu_custom_call.1} parent=15 // pred_fallthru
          _
      $region16: #{tpu_custom_call.1} parent=5 // pred_fallthru
        _
      %p510 = scmp.le.s32.totalorder 1, %s29
      %p511 = scmp.lt.s32.totalorder %s29, 5
      %p512 = pnand %p510, %p511
      %p513 = pneg %p512
      // Predicated region
      $region61: #{tpu_custom_call.1} parent=5 // pred_check
        _
      $region62: #{tpu_custom_call.1} parent=5 // pred_check_branch
        %515 = sbr.rel (%p512) target = $region64
      $region63: #{tpu_custom_call.1} parent=5 // pred_region
        %s516 = ssub.s32 %s29, 1
        %s517 = sand.u32 %s54, 1
        %s518 = scalar_lea.sflag [#allocation5], %s517
        %s519 = sand.u32 %s54, 1
        %s520 = smul.addr %s519, 8
        %s521 = scalar_lea.vmem [#allocation4], %s520
        // Predicated region
        $region65: #{tpu_custom_call.1} parent=63 // pred_check
          %p522 = pneg %p67
        $region66: #{tpu_custom_call.1} parent=63 // pred_check_branch
          %524 = sbr.rel (%p522) target = $region68
        $region67: #{tpu_custom_call.1} parent=63 // pred_region
          %525 = dma.done %s518, 128
        $region68: #{tpu_custom_call.1} parent=63 // pred_fallthru
          _
        %s526 = sand.u32 %s34, 1
        %s527 = scalar_lea.sflag [#allocation8], %s526
        %s528 = sand.u32 %s106, 1
        %s529 = scalar_lea.vmem [#allocation7], %s528
        // Predicated region
        $region69: #{tpu_custom_call.1} parent=63 // pred_check
          %p530 = pneg %p119
        $region70: #{tpu_custom_call.1} parent=63 // pred_check_branch
          %532 = sbr.rel (%p530) target = $region72
        $region71: #{tpu_custom_call.1} parent=63 // pred_region
          %533 = dma.done %s527, 16
        $region72: #{tpu_custom_call.1} parent=63 // pred_fallthru
          _
        %s534 = sand.u32 %s34, 1
        %s535 = scalar_lea.sflag [#allocation8], %s534
        %s536 = sand.u32 %s210, 1
        %s537 = smul.addr %s536, 16
        %s538 = scalar_lea.vmem [#allocation9], %s537
        // Predicated region
        $region73: #{tpu_custom_call.1} parent=63 // pred_check
          %p539 = pneg %p223
        $region74: #{tpu_custom_call.1} parent=63 // pred_check_branch
          %541 = sbr.rel (%p539) target = $region76
        $region75: #{tpu_custom_call.1} parent=63 // pred_region
          %542 = dma.done %s535, 256
        $region76: #{tpu_custom_call.1} parent=63 // pred_fallthru
          _
        %s543 = sand.u32 %s34, 1
        %s544 = scalar_lea.sflag [#allocation11], %s543
        %s545 = sand.u32 %s236, 1
        %s546 = smul.addr %s545, 16
        %s547 = scalar_lea.vmem [#allocation10], %s546
        // Predicated region
        $region77: #{tpu_custom_call.1} parent=63 // pred_check
          %p548 = pneg %p249
        $region78: #{tpu_custom_call.1} parent=63 // pred_check_branch
          %550 = sbr.rel (%p548) target = $region80
        $region79: #{tpu_custom_call.1} parent=63 // pred_region
          %551 = dma.done %s544, 256
        $region80: #{tpu_custom_call.1} parent=63 // pred_fallthru
          _
        %s552 = sand.u32 %s34, 1
        %s553 = scalar_lea.sflag [#allocation11], %s552
        %s554 = sand.u32 %s262, 1
        %s555 = scalar_lea.vmem [#allocation12], %s554
        // Predicated region
        $region81: #{tpu_custom_call.1} parent=63 // pred_check
          %p556 = pneg %p275
        $region82: #{tpu_custom_call.1} parent=63 // pred_check_branch
          %558 = sbr.rel (%p556) target = $region84
        $region83: #{tpu_custom_call.1} parent=63 // pred_region
          %559 = dma.done %s553, 16
        $region84: #{tpu_custom_call.1} parent=63 // pred_fallthru
          _
        %s560 = sand.u32 %s54, 1
        %s561 = scalar_lea.sflag [#allocation5], %s560
        %s562 = sand.u32 %s54, 1
        %s563 = smul.addr %s562, 8
        %s564 = scalar_lea.vmem [#allocation4], %s563
        %p565 = pneg %p67
        %p566 = pneg %p64
        %p567 = scmp.lt.s32.totalorder %s39, 1
        %s568 = scalar_select %p567, %s39, 1
        %s569 = scalar_lea.vmem %s1, %s568
        %p570 = pneg %p93
        %p571 = pneg %p90
        %s572 = sand.u32 %s34, 1
        %s573 = scalar_lea.sflag [#allocation8], %s572
        %s574 = sand.u32 %s106, 1
        %s575 = scalar_lea.vmem [#allocation7], %s574
        %p576 = pneg %p119
        %p577 = pneg %p116
        %p578 = scmp.lt.s32.totalorder %s39, 1
        %s579 = scalar_select %p578, %s39, 1
        %s580 = smul.addr %s579, 4
        %s581 = smul.addr %s580, 4
        %s582 = scalar_lea.vmem %s3, %s581
        %p583 = pneg %p145
        %p584 = pneg %p142
        %p585 = scmp.lt.s32.totalorder %s39, 1
        %s586 = scalar_select %p585, %s39, 1
        %s587 = smul.addr %s586, 4
        %s588 = smul.addr %s587, 4
        %s589 = scalar_lea.vmem %s4, %s588
        %p590 = pneg %p171
        %p591 = pneg %p168
        %p592 = scmp.lt.s32.totalorder %s39, 1
        %s593 = scalar_select %p592, %s39, 1
        %s594 = smul.addr %s593, 4
        %s595 = smul.addr %s594, 4
        %s596 = scalar_lea.vmem %s5, %s595
        %p597 = pneg %p197
        %p598 = pneg %p194
        %s599 = sand.u32 %s34, 1
        %s600 = scalar_lea.sflag [#allocation8], %s599
        %s601 = sand.u32 %s210, 1
        %s602 = smul.addr %s601, 16
        %s603 = scalar_lea.vmem [#allocation9], %s602
        %p604 = pneg %p223
        %p605 = pneg %p220
        %s606 = sand.u32 %s34, 1
        %s607 = scalar_lea.sflag [#allocation11], %s606
        %s608 = sand.u32 %s236, 1
        %s609 = smul.addr %s608, 16
        %s610 = scalar_lea.vmem [#allocation10], %s609
        %p611 = pneg %p249
        %p612 = pneg %p246
        %s613 = sand.u32 %s34, 1
        %s614 = scalar_lea.sflag [#allocation11], %s613
        %s615 = sand.u32 %s262, 1
        %s616 = scalar_lea.vmem [#allocation12], %s615
        %p617 = pneg %p275
        %p618 = pneg %p272
        %p619 = scmp.lt.s32.totalorder %s39, 1
        %s620 = scalar_select %p619, %s39, 1
        %s621 = smul.addr %s620, 8
        %s622 = smul.addr %s621, 4
        %s623 = scalar_lea.vmem %s9, %s622
        %p624 = pneg %p301
        %p625 = pneg %p298
        %p626 = scmp.lt.s32.totalorder %s39, 1
        %s627 = scalar_select %p626, %s39, 1
        %s628 = scalar_lea.vmem %s10, %s627
        %p629 = pneg %p327
        %p630 = pneg %p324
        %p631 = pneg %p353
        %p632 = pneg %p350
        %s633 = sand.u32 %s340, 1
        %s634 = scalar_lea.sflag [#allocation6], %s633
        %s635 = sand.u32 %s340, 1
        %s636 = smul.addr %s635, 8
        %s637 = scalar_lea.vmem [#allocation13], %s636
        %p638 = scmp.lt.s32.totalorder %s39, 1
        %s639 = scalar_select %p638, %s39, 1
        %s640 = scalar_lea.vmem %s1, %s639
        %p641 = scmp.lt.s32.totalorder %s39, 1
        %s642 = scalar_select %p641, %s39, 1
        %s643 = smul.addr %s642, 4
        %s644 = smul.addr %s643, 4
        %s645 = scalar_lea.vmem %s3, %s644
        %p646 = scmp.lt.s32.totalorder %s39, 1
        %s647 = scalar_select %p646, %s39, 1
        %s648 = smul.addr %s647, 4
        %s649 = smul.addr %s648, 4
        %s650 = scalar_lea.vmem %s4, %s649
        %p651 = scmp.lt.s32.totalorder %s39, 1
        %s652 = scalar_select %p651, %s39, 1
        %s653 = smul.addr %s652, 4
        %s654 = smul.addr %s653, 4
        %s655 = scalar_lea.vmem %s5, %s654
        %p656 = scmp.lt.s32.totalorder %s39, 1
        %s657 = scalar_select %p656, %s39, 1
        %s658 = smul.addr %s657, 8
        %s659 = smul.addr %s658, 4
        %s660 = scalar_lea.vmem %s9, %s659
        %p661 = scmp.lt.s32.totalorder %s39, 1
        %s662 = scalar_select %p661, %s39, 1
        %s663 = scalar_lea.vmem %s10, %s662
        %p665 = scmp.eq.s32.totalorder %s39, 0
        // Predicated region
        $region85: #{tpu_custom_call.1} parent=63 // pred_check
          %p666 = pneg %p665
        $region86: #{tpu_custom_call.1} parent=63 // pred_check_branch
          %668 = sbr.rel (%p666) target = $region88
        $region87: #{tpu_custom_call.1} parent=63 // pred_region
          %v669 = vld [vmem:[%s521] sm:$0xff]
          %vm670 = vcmask 261120
          %671 = vst.msk [vmem:[#allocation2] sm:$0xff] %vm670, %v669
        $region88: #{tpu_custom_call.1} parent=63 // pred_fallthru
          _
        %v672 = vld [vmem:[#allocation2] sm:$0xff]
        %v673 = vld [vmem:[%s640] sm:$0x1]
        %v674 = vld [vmem:[%s529] sm:$0x1]
        %vm675 = vcmask 261120
        %v676 = vsel %vm675, %v672, 0.0
        %677 = vadd.xlane.f32.xlu0 %v676
        %v678 = vpop.xlane.xlu0 %677
        %v679 = vrcp.pop 32.0
        %v680 = vmul.f32 %v678, %v679
        %v681 = vsub.f32 %v672, %v680
        %v682 = vmul.f32 %v681, %v681
        %v683 = vsel %vm675, %v682, 0.0
        %684 = vadd.xlane.f32.xlu0 %v683
        %v685 = vpop.xlane.xlu0 %684
        %v686 = vmul.f32 %v685, %v679
        %v687 = vadd.f32 %v686, 1e-05
        %v688 = vrsqrt.pop %v687
        %v689 = vmul.f32 %v681, %v688
        %v691 = vlaneseq
        %v692 = vshrl.u32 %v691, 7
        %v693 = vsub.s32 0, %v692
        %v694 = vrot.slane %v673, %v693
        %v696 = vmul.f32 %v689, %v694
        %v698 = vlaneseq
        %v699 = vshrl.u32 %v698, 7
        %v700 = vsub.s32 0, %v699
        %v701 = vrot.slane %v674, %v700
        %v703 = vadd.f32 %v696, %v701
        %v704 = vpack.c.bf16 %v703, %v703
        %v705 = vld [vmem:[%s645] sm:$0xf]
        %v706 = vld [vmem:[%s645 + $0x4] sm:$0xf]
        %v707 = vld [vmem:[%s645 + $0x8] sm:$0xf]
        %v708 = vld [vmem:[%s645 + $0xc] sm:$0xf]
        %v713 = vunpack.c.l.b16 %v705
        %v714 = vunpack.c.l.b16 %v706
        %v715 = vunpack.c.l.b16 %v707
        %v716 = vunpack.c.l.b16 %v708
        %v717 = vpack.c.b16 %v714, %v713
        %v718 = vpack.c.b16 %v716, %v715
        %v722 = vsel %vm675, %v704, 0
        %724 = vmatprep.subr.bf16.mxu0 0
        %725 = vmatpush1.bf16.msra.mxu0 %v717
        %726 = vmatprep.subr.bf16.mxu0 0
        %727 = vmatpush1.bf16.msra.mxu0 %v718
        %728 = vmatprep.subr.bf16.mxu0 0
        %729 = vmatpush1.bf16.msra.mxu0 0
        %730 = vmatprep.subr.bf16.mxu0 0
        %731 = vmatpush1.bf16.msra.mxu0 0
        %732 = vmatprep.subr.bf16.mxu0 0
        %733 = vmatpush1.bf16.msra.mxu0 0
        %734 = vmatprep.subr.bf16.mxu0 0
        %735 = vmatpush1.bf16.msra.mxu0 0
        %736 = vmatprep.subr.bf16.mxu0 0
        %737 = vmatpush1.bf16.msra.mxu0 0
        %738 = vmatprep.subr.bf16.mxu0 0
        %739 = vmatpush1.bf16.msra.mxu0 0
        %740 = vmatprep.subr.bf16.mxu0 0
        %741 = vmatpush1.bf16.msra.mxu0 0
        %742 = vmatprep.subr.bf16.mxu0 0
        %743 = vmatpush1.bf16.msra.mxu0 0
        %744 = vmatprep.subr.bf16.mxu0 0
        %745 = vmatpush1.bf16.msra.mxu0 0
        %746 = vmatprep.subr.bf16.mxu0 0
        %747 = vmatpush1.bf16.msra.mxu0 0
        %748 = vmatprep.subr.bf16.mxu0 0
        %749 = vmatpush1.bf16.msra.mxu0 0
        %750 = vmatprep.subr.bf16.mxu0 0
        %751 = vmatpush1.bf16.msra.mxu0 0
        %752 = vmatprep.subr.bf16.mxu0 0
        %753 = vmatpush1.bf16.msra.mxu0 0
        %754 = vmatprep.subr.bf16.mxu0 0
        %755 = vmatpush1.bf16.msra.mxu0 0
        %756 = vmatprep.mubr.bf16.mxu0 0
        %757 = vmatmul.mubr.bf16.gmra.mrb[0].mxu0 %v722
        %v758 = vpop.f32.mrb[0].mxu0
        %v759 = vadd.f32 0.0, %v758
        %v760 = vpop.f32.mrb[0].mxu0
        %v761 = vpop.f32.mrb[0].mxu0
        %v762 = vpop.f32.mrb[0].mxu0
        %763 = vdwg.mxu0
        %v764 = vld [vmem:[%s650] sm:$0xf]
        %v765 = vld [vmem:[%s650 + $0x4] sm:$0xf]
        %v766 = vld [vmem:[%s650 + $0x8] sm:$0xf]
        %v767 = vld [vmem:[%s650 + $0xc] sm:$0xf]
        %v772 = vunpack.c.l.b16 %v764
        %v773 = vunpack.c.l.b16 %v765
        %v774 = vunpack.c.l.b16 %v766
        %v775 = vunpack.c.l.b16 %v767
        %v776 = vpack.c.b16 %v773, %v772
        %v777 = vpack.c.b16 %v775, %v774
        %780 = vmatprep.subr.bf16.mxu0 0
        %781 = vmatpush1.bf16.msra.mxu0 %v776
        %782 = vmatprep.subr.bf16.mxu0 0
        %783 = vmatpush1.bf16.msra.mxu0 %v777
        %784 = vmatprep.subr.bf16.mxu0 0
        %785 = vmatpush1.bf16.msra.mxu0 0
        %786 = vmatprep.subr.bf16.mxu0 0
        %787 = vmatpush1.bf16.msra.mxu0 0
        %788 = vmatprep.subr.bf16.mxu0 0
        %789 = vmatpush1.bf16.msra.mxu0 0
        %790 = vmatprep.subr.bf16.mxu0 0
        %791 = vmatpush1.bf16.msra.mxu0 0
        %792 = vmatprep.subr.bf16.mxu0 0
        %793 = vmatpush1.bf16.msra.mxu0 0
        %794 = vmatprep.subr.bf16.mxu0 0
        %795 = vmatpush1.bf16.msra.mxu0 0
        %796 = vmatprep.subr.bf16.mxu0 0
        %797 = vmatpush1.bf16.msra.mxu0 0
        %798 = vmatprep.subr.bf16.mxu0 0
        %799 = vmatpush1.bf16.msra.mxu0 0
        %800 = vmatprep.subr.bf16.mxu0 0
        %801 = vmatpush1.bf16.msra.mxu0 0
        %802 = vmatprep.subr.bf16.mxu0 0
        %803 = vmatpush1.bf16.msra.mxu0 0
        %804 = vmatprep.subr.bf16.mxu0 0
        %805 = vmatpush1.bf16.msra.mxu0 0
        %806 = vmatprep.subr.bf16.mxu0 0
        %807 = vmatpush1.bf16.msra.mxu0 0
        %808 = vmatprep.subr.bf16.mxu0 0
        %809 = vmatpush1.bf16.msra.mxu0 0
        %810 = vmatprep.subr.bf16.mxu0 0
        %811 = vmatpush1.bf16.msra.mxu0 0
        %812 = vmatprep.mubr.bf16.mxu0 0
        %813 = vmatmul.mubr.bf16.gmra.mrb[0].mxu0 %v722
        %v814 = vpop.f32.mrb[0].mxu0
        %v815 = vadd.f32 0.0, %v814
        %v816 = vpop.f32.mrb[0].mxu0
        %v817 = vpop.f32.mrb[0].mxu0
        %v818 = vpop.f32.mrb[0].mxu0
        %819 = vdwg.mxu0
        %v820 = vld [vmem:[%s655] sm:$0xf]
        %v821 = vld [vmem:[%s655 + $0x4] sm:$0xf]
        %v822 = vld [vmem:[%s655 + $0x8] sm:$0xf]
        %v823 = vld [vmem:[%s655 + $0xc] sm:$0xf]
        %v828 = vunpack.c.l.b16 %v820
        %v829 = vunpack.c.l.b16 %v821
        %v830 = vunpack.c.l.b16 %v822
        %v831 = vunpack.c.l.b16 %v823
        %v832 = vpack.c.b16 %v829, %v828
        %v833 = vpack.c.b16 %v831, %v830
        %836 = vmatprep.subr.bf16.mxu0 0
        %837 = vmatpush1.bf16.msra.mxu0 %v832
        %838 = vmatprep.subr.bf16.mxu0 0
        %839 = vmatpush1.bf16.msra.mxu0 %v833
        %840 = vmatprep.subr.bf16.mxu0 0
        %841 = vmatpush1.bf16.msra.mxu0 0
        %842 = vmatprep.subr.bf16.mxu0 0
        %843 = vmatpush1.bf16.msra.mxu0 0
        %844 = vmatprep.subr.bf16.mxu0 0
        %845 = vmatpush1.bf16.msra.mxu0 0
        %846 = vmatprep.subr.bf16.mxu0 0
        %847 = vmatpush1.bf16.msra.mxu0 0
        %848 = vmatprep.subr.bf16.mxu0 0
        %849 = vmatpush1.bf16.msra.mxu0 0
        %850 = vmatprep.subr.bf16.mxu0 0
        %851 = vmatpush1.bf16.msra.mxu0 0
        %852 = vmatprep.subr.bf16.mxu0 0
        %853 = vmatpush1.bf16.msra.mxu0 0
        %854 = vmatprep.subr.bf16.mxu0 0
        %855 = vmatpush1.bf16.msra.mxu0 0
        %856 = vmatprep.subr.bf16.mxu0 0
        %857 = vmatpush1.bf16.msra.mxu0 0
        %858 = vmatprep.subr.bf16.mxu0 0
        %859 = vmatpush1.bf16.msra.mxu0 0
        %860 = vmatprep.subr.bf16.mxu0 0
        %861 = vmatpush1.bf16.msra.mxu0 0
        %862 = vmatprep.subr.bf16.mxu0 0
        %863 = vmatpush1.bf16.msra.mxu0 0
        %864 = vmatprep.subr.bf16.mxu0 0
        %865 = vmatpush1.bf16.msra.mxu0 0
        %866 = vmatprep.subr.bf16.mxu0 0
        %867 = vmatpush1.bf16.msra.mxu0 0
        %868 = vmatprep.mubr.bf16.mxu0 0
        %869 = vmatmul.mubr.bf16.gmra.mrb[0].mxu0 %v722
        %v870 = vpop.f32.mrb[0].mxu0
        %v871 = vadd.f32 0.0, %v870
        %v872 = vpop.f32.mrb[0].mxu0
        %v873 = vpop.f32.mrb[0].mxu0
        %v874 = vpop.f32.mrb[0].mxu0
        %875 = vdwg.mxu0
        %v876 = vpack.c.bf16 %v871, %v871
        %v877 = vpack.c.bf16 %v759, %v759
        %v878 = vpack.c.bf16 %v815, %v815
        %vm879 = vcmask 64512
        %v881 = vsel %vm879, %v877, 0
        %v884 = vsel %vm879, %v878, 0
        %886 = vmatprep.subr.bf16.mxu0 0
        %887 = vmatpush1.bf16.xpose.msra.mxu0 %v884
        %888 = vmatprep.subr.bf16.mxu0 0
        %889 = vmatpush1.bf16.xpose.msra.mxu0 0
        %890 = vmatprep.subr.bf16.mxu0 0
        %891 = vmatpush1.bf16.xpose.msra.mxu0 0
        %892 = vmatprep.subr.bf16.mxu0 0
        %893 = vmatpush1.bf16.xpose.msra.mxu0 0
        %894 = vmatprep.subr.bf16.mxu0 0
        %895 = vmatpush1.bf16.xpose.msra.mxu0 0
        %896 = vmatprep.subr.bf16.mxu0 0
        %897 = vmatpush1.bf16.xpose.msra.mxu0 0
        %898 = vmatprep.subr.bf16.mxu0 0
        %899 = vmatpush1.bf16.xpose.msra.mxu0 0
        %900 = vmatprep.subr.bf16.mxu0 0
        %901 = vmatpush1.bf16.xpose.msra.mxu0 0
        %902 = vmatprep.subr.bf16.mxu0 0
        %903 = vmatpush1.bf16.xpose.msra.mxu0 0
        %904 = vmatprep.subr.bf16.mxu0 0
        %905 = vmatpush1.bf16.xpose.msra.mxu0 0
        %906 = vmatprep.subr.bf16.mxu0 0
        %907 = vmatpush1.bf16.xpose.msra.mxu0 0
        %908 = vmatprep.subr.bf16.mxu0 0
        %909 = vmatpush1.bf16.xpose.msra.mxu0 0
        %910 = vmatprep.subr.bf16.mxu0 0
        %911 = vmatpush1.bf16.xpose.msra.mxu0 0
        %912 = vmatprep.subr.bf16.mxu0 0
        %913 = vmatpush1.bf16.xpose.msra.mxu0 0
        %914 = vmatprep.subr.bf16.mxu0 0
        %915 = vmatpush1.bf16.xpose.msra.mxu0 0
        %916 = vmatprep.subr.bf16.mxu0 0
        %917 = vmatpush1.bf16.xpose.msra.mxu0 0
        %918 = vmatprep.mubr.bf16.mxu0 0
        %919 = vmatmul.mubr.bf16.gmra.mrb[0].mxu0 %v881
        %v920 = vpop.f32.mrb[0].mxu0
        %v921 = vadd.f32 0.0, %v920
        %v922 = vpop.f32.mrb[0].mxu0
        %v923 = vpop.f32.mrb[0].mxu0
        %v924 = vpop.f32.mrb[0].mxu0
        %925 = vdwg.mxu0
        %v926 = vsel %vm879, %v921, -inf
        %927 = vmax.xlane.f32.xlu0 %v926
        %v928 = vpop.xlane.xlu0 %927
        %v929 = vsub.f32 %v921, %v928
        %v930 = vmul.f32 %v929, 1.442695
        %v931 = vpow.pop %v930
        %v932 = vsel %vm879, %v931, 0.0
        %933 = vadd.xlane.f32.xlu0 %v932
        %v934 = vpop.xlane.xlu0 %933
        %v935 = vrcp.pop %v934
        %v936 = vpack.c.bf16 %v931, %v931
        %v938 = vsel %vm879, %v936, 0
        %vm940 = vcmask 1043456
        %v942 = vsel %vm940, %v876, 0
        %944 = vmatprep.subr.bf16.mxu0 0
        %945 = vmatpush1.bf16.msra.mxu0 %v942
        %946 = vmatprep.subr.bf16.mxu0 0
        %947 = vmatpush1.bf16.msra.mxu0 0
        %948 = vmatprep.subr.bf16.mxu0 0
        %949 = vmatpush1.bf16.msra.mxu0 0
        %950 = vmatprep.subr.bf16.mxu0 0
        %951 = vmatpush1.bf16.msra.mxu0 0
        %952 = vmatprep.subr.bf16.mxu0 0
        %953 = vmatpush1.bf16.msra.mxu0 0
        %954 = vmatprep.subr.bf16.mxu0 0
        %955 = vmatpush1.bf16.msra.mxu0 0
        %956 = vmatprep.subr.bf16.mxu0 0
        %957 = vmatpush1.bf16.msra.mxu0 0
        %958 = vmatprep.subr.bf16.mxu0 0
        %959 = vmatpush1.bf16.msra.mxu0 0
        %960 = vmatprep.subr.bf16.mxu0 0
        %961 = vmatpush1.bf16.msra.mxu0 0
        %962 = vmatprep.subr.bf16.mxu0 0
        %963 = vmatpush1.bf16.msra.mxu0 0
        %964 = vmatprep.subr.bf16.mxu0 0
        %965 = vmatpush1.bf16.msra.mxu0 0
        %966 = vmatprep.subr.bf16.mxu0 0
        %967 = vmatpush1.bf16.msra.mxu0 0
        %968 = vmatprep.subr.bf16.mxu0 0
        %969 = vmatpush1.bf16.msra.mxu0 0
        %970 = vmatprep.subr.bf16.mxu0 0
        %971 = vmatpush1.bf16.msra.mxu0 0
        %972 = vmatprep.subr.bf16.mxu0 0
        %973 = vmatpush1.bf16.msra.mxu0 0
        %974 = vmatprep.subr.bf16.mxu0 0
        %975 = vmatpush1.bf16.msra.mxu0 0
        %976 = vmatprep.mubr.bf16.mxu0 0
        %977 = vmatmul.mubr.bf16.gmra.mrb[0].mxu0 %v938
        %v978 = vpop.f32.mrb[0].mxu0
        %v979 = vadd.f32 0.0, %v978
        %v980 = vpop.f32.mrb[0].mxu0
        %v981 = vpop.f32.mrb[0].mxu0
        %v982 = vpop.f32.mrb[0].mxu0
        %983 = vdwg.mxu0
        %v984 = vmul.f32 %v935, %v979
        %985 = vst.msk [vmem:[#allocation3] sm:$0xff] %vm879, %v984
        %987 = vrot.lane.b32.xlu0 %v877, 120
        %v988 = vpop.permute.xlu0 %987
        %990 = vrot.lane.b32.xlu0 %v878, 120
        %v991 = vpop.permute.xlu0 %990
        %v993 = vsel %vm879, %v988, 0
        %v996 = vsel %vm879, %v991, 0
        %998 = vmatprep.subr.bf16.mxu0 0
        %999 = vmatpush1.bf16.xpose.msra.mxu0 %v996
        %1000 = vmatprep.subr.bf16.mxu0 0
        %1001 = vmatpush1.bf16.xpose.msra.mxu0 0
        %1002 = vmatprep.subr.bf16.mxu0 0
        %1003 = vmatpush1.bf16.xpose.msra.mxu0 0
        %1004 = vmatprep.subr.bf16.mxu0 0
        %1005 = vmatpush1.bf16.xpose.msra.mxu0 0
        %1006 = vmatprep.subr.bf16.mxu0 0
        %1007 = vmatpush1.bf16.xpose.msra.mxu0 0
        %1008 = vmatprep.subr.bf16.mxu0 0
        %1009 = vmatpush1.bf16.xpose.msra.mxu0 0
        %1010 = vmatprep.subr.bf16.mxu0 0
        %1011 = vmatpush1.bf16.xpose.msra.mxu0 0
        %1012 = vmatprep.subr.bf16.mxu0 0
        %1013 = vmatpush1.bf16.xpose.msra.mxu0 0
        %1014 = vmatprep.subr.bf16.mxu0 0
        %1015 = vmatpush1.bf16.xpose.msra.mxu0 0
        %1016 = vmatprep.subr.bf16.mxu0 0
        %1017 = vmatpush1.bf16.xpose.msra.mxu0 0
        %1018 = vmatprep.subr.bf16.mxu0 0
        %1019 = vmatpush1.bf16.xpose.msra.mxu0 0
        %1020 = vmatprep.subr.bf16.mxu0 0
        %1021 = vmatpush1.bf16.xpose.msra.mxu0 0
        %1022 = vmatprep.subr.bf16.mxu0 0
        %1023 = vmatpush1.bf16.xpose.msra.mxu0 0
        %1024 = vmatprep.subr.bf16.mxu0 0
        %1025 = vmatpush1.bf16.xpose.msra.mxu0 0
        %1026 = vmatprep.subr.bf16.mxu0 0
        %1027 = vmatpush1.bf16.xpose.msra.mxu0 0
        %1028 = vmatprep.subr.bf16.mxu0 0
        %1029 = vmatpush1.bf16.xpose.msra.mxu0 0
        %1030 = vmatprep.mubr.bf16.mxu0 0
        %1031 = vmatmul.mubr.bf16.gmra.mrb[0].mxu0 %v993
        %v1032 = vpop.f32.mrb[0].mxu0
        %v1033 = vadd.f32 0.0, %v1032
        %v1034 = vpop.f32.mrb[0].mxu0
        %v1035 = vpop.f32.mrb[0].mxu0
        %v1036 = vpop.f32.mrb[0].mxu0
        %1037 = vdwg.mxu0
        %v1038 = vsel %vm879, %v1033, -inf
        %1039 = vmax.xlane.f32.xlu0 %v1038
        %v1040 = vpop.xlane.xlu0 %1039
        %v1041 = vsub.f32 %v1033, %v1040
        %v1042 = vmul.f32 %v1041, 1.442695
        %v1043 = vpow.pop %v1042
        %v1044 = vsel %vm879, %v1043, 0.0
        %1045 = vadd.xlane.f32.xlu0 %v1044
        %v1046 = vpop.xlane.xlu0 %1045
        %v1047 = vrcp.pop %v1046
        %v1048 = vpack.c.bf16 %v1043, %v1043
        %1050 = vrot.lane.b32.xlu0 %v876, 120
        %v1051 = vpop.permute.xlu0 %1050
        %v1053 = vsel %vm879, %v1048, 0
        %v1056 = vsel %vm940, %v1051, 0
        %1058 = vmatprep.subr.bf16.mxu0 0
        %1059 = vmatpush1.bf16.msra.mxu0 %v1056
        %1060 = vmatprep.subr.bf16.mxu0 0
        %1061 = vmatpush1.bf16.msra.mxu0 0
        %1062 = vmatprep.subr.bf16.mxu0 0
        %1063 = vmatpush1.bf16.msra.mxu0 0
        %1064 = vmatprep.subr.bf16.mxu0 0
        %1065 = vmatpush1.bf16.msra.mxu0 0
        %1066 = vmatprep.subr.bf16.mxu0 0
        %1067 = vmatpush1.bf16.msra.mxu0 0
        %1068 = vmatprep.subr.bf16.mxu0 0
        %1069 = vmatpush1.bf16.msra.mxu0 0
        %1070 = vmatprep.subr.bf16.mxu0 0
        %1071 = vmatpush1.bf16.msra.mxu0 0
        %1072 = vmatprep.subr.bf16.mxu0 0
        %1073 = vmatpush1.bf16.msra.mxu0 0
        %1074 = vmatprep.subr.bf16.mxu0 0
        %1075 = vmatpush1.bf16.msra.mxu0 0
        %1076 = vmatprep.subr.bf16.mxu0 0
        %1077 = vmatpush1.bf16.msra.mxu0 0
        %1078 = vmatprep.subr.bf16.mxu0 0
        %1079 = vmatpush1.bf16.msra.mxu0 0
        %1080 = vmatprep.subr.bf16.mxu0 0
        %1081 = vmatpush1.bf16.msra.mxu0 0
        %1082 = vmatprep.subr.bf16.mxu0 0
        %1083 = vmatpush1.bf16.msra.mxu0 0
        %1084 = vmatprep.subr.bf16.mxu0 0
        %1085 = vmatpush1.bf16.msra.mxu0 0
        %1086 = vmatprep.subr.bf16.mxu0 0
        %1087 = vmatpush1.bf16.msra.mxu0 0
        %1088 = vmatprep.subr.bf16.mxu0 0
        %1089 = vmatpush1.bf16.msra.mxu0 0
        %1090 = vmatprep.mubr.bf16.mxu0 0
        %1091 = vmatmul.mubr.bf16.gmra.mrb[0].mxu0 %v1053
        %v1092 = vpop.f32.mrb[0].mxu0
        %v1093 = vadd.f32 0.0, %v1092
        %v1094 = vpop.f32.mrb[0].mxu0
        %v1095 = vpop.f32.mrb[0].mxu0
        %v1096 = vpop.f32.mrb[0].mxu0
        %1097 = vdwg.mxu0
        %v1098 = vmul.f32 %v1047, %v1093
        %1100 = vrot.lane.b32.xlu0 %v1098, 8
        %v1101 = vpop.permute.xlu0 %1100
        %vm1103 = vcmask 130112
        %1104 = vst.msk [vmem:[#allocation3] sm:$0xff] %vm1103, %v1101
        %1105 = vrot.lane.b32.xlu0 %v877, 112
        %v1106 = vpop.permute.xlu0 %1105
        %1107 = vrot.lane.b32.xlu0 %v878, 112
        %v1108 = vpop.permute.xlu0 %1107
        %v1110 = vsel %vm879, %v1106, 0
        %v1113 = vsel %vm879, %v1108, 0
        %1115 = vmatprep.subr.bf16.mxu0 0
        %1116 = vmatpush1.bf16.xpose.msra.mxu0 %v1113
        %1117 = vmatprep.subr.bf16.mxu0 0
        %1118 = vmatpush1.bf16.xpose.msra.mxu0 0
        %1119 = vmatprep.subr.bf16.mxu0 0
        %1120 = vmatpush1.bf16.xpose.msra.mxu0 0
        %1121 = vmatprep.subr.bf16.mxu0 0
        %1122 = vmatpush1.bf16.xpose.msra.mxu0 0
        %1123 = vmatprep.subr.bf16.mxu0 0
        %1124 = vmatpush1.bf16.xpose.msra.mxu0 0
        %1125 = vmatprep.subr.bf16.mxu0 0
        %1126 = vmatpush1.bf16.xpose.msra.mxu0 0
        %1127 = vmatprep.subr.bf16.mxu0 0
        %1128 = vmatpush1.bf16.xpose.msra.mxu0 0
        %1129 = vmatprep.subr.bf16.mxu0 0
        %1130 = vmatpush1.bf16.xpose.msra.mxu0 0
        %1131 = vmatprep.subr.bf16.mxu0 0
        %1132 = vmatpush1.bf16.xpose.msra.mxu0 0
        %1133 = vmatprep.subr.bf16.mxu0 0
        %1134 = vmatpush1.bf16.xpose.msra.mxu0 0
        %1135 = vmatprep.subr.bf16.mxu0 0
        %1136 = vmatpush1.bf16.xpose.msra.mxu0 0
        %1137 = vmatprep.subr.bf16.mxu0 0
        %1138 = vmatpush1.bf16.xpose.msra.mxu0 0
        %1139 = vmatprep.subr.bf16.mxu0 0
        %1140 = vmatpush1.bf16.xpose.msra.mxu0 0
        %1141 = vmatprep.subr.bf16.mxu0 0
        %1142 = vmatpush1.bf16.xpose.msra.mxu0 0
        %1143 = vmatprep.subr.bf16.mxu0 0
        %1144 = vmatpush1.bf16.xpose.msra.mxu0 0
        %1145 = vmatprep.subr.bf16.mxu0 0
        %1146 = vmatpush1.bf16.xpose.msra.mxu0 0
        %1147 = vmatprep.mubr.bf16.mxu0 0
        %1148 = vmatmul.mubr.bf16.gmra.mrb[0].mxu0 %v1110
        %v1149 = vpop.f32.mrb[0].mxu0
        %v1150 = vadd.f32 0.0, %v1149
        %v1151 = vpop.f32.mrb[0].mxu0
        %v1152 = vpop.f32.mrb[0].mxu0
        %v1153 = vpop.f32.mrb[0].mxu0
        %1154 = vdwg.mxu0
        %v1155 = vsel %vm879, %v1150, -inf
        %1156 = vmax.xlane.f32.xlu0 %v1155
        %v1157 = vpop.xlane.xlu0 %1156
        %v1158 = vsub.f32 %v1150, %v1157
        %v1159 = vmul.f32 %v1158, 1.442695
        %v1160 = vpow.pop %v1159
        %v1161 = vsel %vm879, %v1160, 0.0
        %1162 = vadd.xlane.f32.xlu0 %v1161
        %v1163 = vpop.xlane.xlu0 %1162
        %v1164 = vrcp.pop %v1163
        %v1165 = vpack.c.bf16 %v1160, %v1160
        %1166 = vrot.lane.b32.xlu0 %v876, 112
        %v1167 = vpop.permute.xlu0 %1166
        %v1169 = vsel %vm879, %v1165, 0
        %v1172 = vsel %vm940, %v1167, 0
        %1174 = vmatprep.subr.bf16.mxu0 0
        %1175 = vmatpush1.bf16.msra.mxu0 %v1172
        %1176 = vmatprep.subr.bf16.mxu0 0
        %1177 = vmatpush1.bf16.msra.mxu0 0
        %1178 = vmatprep.subr.bf16.mxu0 0
        %1179 = vmatpush1.bf16.msra.mxu0 0
        %1180 = vmatprep.subr.bf16.mxu0 0
        %1181 = vmatpush1.bf16.msra.mxu0 0
        %1182 = vmatprep.subr.bf16.mxu0 0
        %1183 = vmatpush1.bf16.msra.mxu0 0
        %1184 = vmatprep.subr.bf16.mxu0 0
        %1185 = vmatpush1.bf16.msra.mxu0 0
        %1186 = vmatprep.subr.bf16.mxu0 0
        %1187 = vmatpush1.bf16.msra.mxu0 0
        %1188 = vmatprep.subr.bf16.mxu0 0
        %1189 = vmatpush1.bf16.msra.mxu0 0
        %1190 = vmatprep.subr.bf16.mxu0 0
        %1191 = vmatpush1.bf16.msra.mxu0 0
        %1192 = vmatprep.subr.bf16.mxu0 0
        %1193 = vmatpush1.bf16.msra.mxu0 0
        %1194 = vmatprep.subr.bf16.mxu0 0
        %1195 = vmatpush1.bf16.msra.mxu0 0
        %1196 = vmatprep.subr.bf16.mxu0 0
        %1197 = vmatpush1.bf16.msra.mxu0 0
        %1198 = vmatprep.subr.bf16.mxu0 0
        %1199 = vmatpush1.bf16.msra.mxu0 0
        %1200 = vmatprep.subr.bf16.mxu0 0
        %1201 = vmatpush1.bf16.msra.mxu0 0
        %1202 = vmatprep.subr.bf16.mxu0 0
        %1203 = vmatpush1.bf16.msra.mxu0 0
        %1204 = vmatprep.subr.bf16.mxu0 0
        %1205 = vmatpush1.bf16.msra.mxu0 0
        %1206 = vmatprep.mubr.bf16.mxu0 0
        %1207 = vmatmul.mubr.bf16.gmra.mrb[0].mxu0 %v1169
        %v1208 = vpop.f32.mrb[0].mxu0
        %v1209 = vadd.f32 0.0, %v1208
        %v1210 = vpop.f32.mrb[0].mxu0
        %v1211 = vpop.f32.mrb[0].mxu0
        %v1212 = vpop.f32.mrb[0].mxu0
        %1213 = vdwg.mxu0
        %v1214 = vmul.f32 %v1164, %v1209
        %1216 = vrot.lane.b32.xlu0 %v1214, 16
        %v1217 = vpop.permute.xlu0 %1216
        %vm1219 = vcmask 195712
        %1220 = vst.msk [vmem:[#allocation3] sm:$0xff] %vm1219, %v1217
        %1221 = vrot.lane.b32.xlu0 %v877, 104
        %v1222 = vpop.permute.xlu0 %1221
        %1223 = vrot.lane.b32.xlu0 %v878, 104
        %v1224 = vpop.permute.xlu0 %1223
        %v1226 = vsel %vm879, %v1222, 0
        %v1229 = vsel %vm879, %v1224, 0
        %1231 = vmatprep.subr.bf16.mxu0 0
        %1232 = vmatpush1.bf16.xpose.msra.mxu0 %v1229
        %1233 = vmatprep.subr.bf16.mxu0 0
        %1234 = vmatpush1.bf16.xpose.msra.mxu0 0
        %1235 = vmatprep.subr.bf16.mxu0 0
        %1236 = vmatpush1.bf16.xpose.msra.mxu0 0
        %1237 = vmatprep.subr.bf16.mxu0 0
        %1238 = vmatpush1.bf16.xpose.msra.mxu0 0
        %1239 = vmatprep.subr.bf16.mxu0 0
        %1240 = vmatpush1.bf16.xpose.msra.mxu0 0
        %1241 = vmatprep.subr.bf16.mxu0 0
        %1242 = vmatpush1.bf16.xpose.msra.mxu0 0
        %1243 = vmatprep.subr.bf16.mxu0 0
        %1244 = vmatpush1.bf16.xpose.msra.mxu0 0
        %1245 = vmatprep.subr.bf16.mxu0 0
        %1246 = vmatpush1.bf16.xpose.msra.mxu0 0
        %1247 = vmatprep.subr.bf16.mxu0 0
        %1248 = vmatpush1.bf16.xpose.msra.mxu0 0
        %1249 = vmatprep.subr.bf16.mxu0 0
        %1250 = vmatpush1.bf16.xpose.msra.mxu0 0
        %1251 = vmatprep.subr.bf16.mxu0 0
        %1252 = vmatpush1.bf16.xpose.msra.mxu0 0
        %1253 = vmatprep.subr.bf16.mxu0 0
        %1254 = vmatpush1.bf16.xpose.msra.mxu0 0
        %1255 = vmatprep.subr.bf16.mxu0 0
        %1256 = vmatpush1.bf16.xpose.msra.mxu0 0
        %1257 = vmatprep.subr.bf16.mxu0 0
        %1258 = vmatpush1.bf16.xpose.msra.mxu0 0
        %1259 = vmatprep.subr.bf16.mxu0 0
        %1260 = vmatpush1.bf16.xpose.msra.mxu0 0
        %1261 = vmatprep.subr.bf16.mxu0 0
        %1262 = vmatpush1.bf16.xpose.msra.mxu0 0
        %1263 = vmatprep.mubr.bf16.mxu0 0
        %1264 = vmatmul.mubr.bf16.gmra.mrb[0].mxu0 %v1226
        %v1265 = vpop.f32.mrb[0].mxu0
        %v1266 = vadd.f32 0.0, %v1265
        %v1267 = vpop.f32.mrb[0].mxu0
        %v1268 = vpop.f32.mrb[0].mxu0
        %v1269 = vpop.f32.mrb[0].mxu0
        %1270 = vdwg.mxu0
        %v1271 = vsel %vm879, %v1266, -inf
        %1272 = vmax.xlane.f32.xlu0 %v1271
        %v1273 = vpop.xlane.xlu0 %1272
        %v1274 = vsub.f32 %v1266, %v1273
        %v1275 = vmul.f32 %v1274, 1.442695
        %v1276 = vpow.pop %v1275
        %v1277 = vsel %vm879, %v1276, 0.0
        %1278 = vadd.xlane.f32.xlu0 %v1277
        %v1279 = vpop.xlane.xlu0 %1278
        %v1280 = vrcp.pop %v1279
        %v1281 = vpack.c.bf16 %v1276, %v1276
        %1282 = vrot.lane.b32.xlu0 %v876, 104
        %v1283 = vpop.permute.xlu0 %1282
        %v1285 = vsel %vm879, %v1281, 0
        %v1288 = vsel %vm940, %v1283, 0
        %1290 = vmatprep.subr.bf16.mxu0 0
        %1291 = vmatpush1.bf16.msra.mxu0 %v1288
        %1292 = vmatprep.subr.bf16.mxu0 0
        %1293 = vmatpush1.bf16.msra.mxu0 0
        %1294 = vmatprep.subr.bf16.mxu0 0
        %1295 = vmatpush1.bf16.msra.mxu0 0
        %1296 = vmatprep.subr.bf16.mxu0 0
        %1297 = vmatpush1.bf16.msra.mxu0 0
        %1298 = vmatprep.subr.bf16.mxu0 0
        %1299 = vmatpush1.bf16.msra.mxu0 0
        %1300 = vmatprep.subr.bf16.mxu0 0
        %1301 = vmatpush1.bf16.msra.mxu0 0
        %1302 = vmatprep.subr.bf16.mxu0 0
        %1303 = vmatpush1.bf16.msra.mxu0 0
        %1304 = vmatprep.subr.bf16.mxu0 0
        %1305 = vmatpush1.bf16.msra.mxu0 0
        %1306 = vmatprep.subr.bf16.mxu0 0
        %1307 = vmatpush1.bf16.msra.mxu0 0
        %1308 = vmatprep.subr.bf16.mxu0 0
        %1309 = vmatpush1.bf16.msra.mxu0 0
        %1310 = vmatprep.subr.bf16.mxu0 0
        %1311 = vmatpush1.bf16.msra.mxu0 0
        %1312 = vmatprep.subr.bf16.mxu0 0
        %1313 = vmatpush1.bf16.msra.mxu0 0
        %1314 = vmatprep.subr.bf16.mxu0 0
        %1315 = vmatpush1.bf16.msra.mxu0 0
        %1316 = vmatprep.subr.bf16.mxu0 0
        %1317 = vmatpush1.bf16.msra.mxu0 0
        %1318 = vmatprep.subr.bf16.mxu0 0
        %1319 = vmatpush1.bf16.msra.mxu0 0
        %1320 = vmatprep.subr.bf16.mxu0 0
        %1321 = vmatpush1.bf16.msra.mxu0 0
        %1322 = vmatprep.mubr.bf16.mxu0 0
        %1323 = vmatmul.mubr.bf16.gmra.mrb[0].mxu0 %v1285
        %v1324 = vpop.f32.mrb[0].mxu0
        %v1325 = vadd.f32 0.0, %v1324
        %v1326 = vpop.f32.mrb[0].mxu0
        %v1327 = vpop.f32.mrb[0].mxu0
        %v1328 = vpop.f32.mrb[0].mxu0
        %1329 = vdwg.mxu0
        %v1330 = vmul.f32 %v1280, %v1325
        %1332 = vrot.lane.b32.xlu0 %v1330, 24
        %v1333 = vpop.permute.xlu0 %1332
        %vm1335 = vcmask 261312
        %1336 = vst.msk [vmem:[#allocation3] sm:$0xff] %vm1335, %v1333
        %v1337 = vld [vmem:[#allocation3] sm:$0xff]
        %v1338 = vpack.c.bf16 %v1337, %v1337
        %v1339 = vld [vmem:[%s538] sm:$0xf]
        %v1340 = vld [vmem:[%s538 + $0x4] sm:$0xf]
        %v1341 = vld [vmem:[%s538 + $0x8] sm:$0xf]
        %v1342 = vld [vmem:[%s538 + $0xc] sm:$0xf]
        %v1347 = vunpack.c.l.b16 %v1339
        %v1348 = vunpack.c.l.b16 %v1340
        %v1349 = vunpack.c.l.b16 %v1341
        %v1350 = vunpack.c.l.b16 %v1342
        %v1351 = vpack.c.b16 %v1348, %v1347
        %v1352 = vpack.c.b16 %v1350, %v1349
        %v1356 = vsel %vm675, %v1338, 0
        %1358 = vmatprep.subr.bf16.mxu0 0
        %1359 = vmatpush1.bf16.msra.mxu0 %v1351
        %1360 = vmatprep.subr.bf16.mxu0 0
        %1361 = vmatpush1.bf16.msra.mxu0 %v1352
        %1362 = vmatprep.subr.bf16.mxu0 0
        %1363 = vmatpush1.bf16.msra.mxu0 0
        %1364 = vmatprep.subr.bf16.mxu0 0
        %1365 = vmatpush1.bf16.msra.mxu0 0
        %1366 = vmatprep.subr.bf16.mxu0 0
        %1367 = vmatpush1.bf16.msra.mxu0 0
        %1368 = vmatprep.subr.bf16.mxu0 0
        %1369 = vmatpush1.bf16.msra.mxu0 0
        %1370 = vmatprep.subr.bf16.mxu0 0
        %1371 = vmatpush1.bf16.msra.mxu0 0
        %1372 = vmatprep.subr.bf16.mxu0 0
        %1373 = vmatpush1.bf16.msra.mxu0 0
        %1374 = vmatprep.subr.bf16.mxu0 0
        %1375 = vmatpush1.bf16.msra.mxu0 0
        %1376 = vmatprep.subr.bf16.mxu0 0
        %1377 = vmatpush1.bf16.msra.mxu0 0
        %1378 = vmatprep.subr.bf16.mxu0 0
        %1379 = vmatpush1.bf16.msra.mxu0 0
        %1380 = vmatprep.subr.bf16.mxu0 0
        %1381 = vmatpush1.bf16.msra.mxu0 0
        %1382 = vmatprep.subr.bf16.mxu0 0
        %1383 = vmatpush1.bf16.msra.mxu0 0
        %1384 = vmatprep.subr.bf16.mxu0 0
        %1385 = vmatpush1.bf16.msra.mxu0 0
        %1386 = vmatprep.subr.bf16.mxu0 0
        %1387 = vmatpush1.bf16.msra.mxu0 0
        %1388 = vmatprep.subr.bf16.mxu0 0
        %1389 = vmatpush1.bf16.msra.mxu0 0
        %1390 = vmatprep.mubr.bf16.mxu0 0
        %1391 = vmatmul.mubr.bf16.gmra.mrb[0].mxu0 %v1356
        %v1392 = vpop.f32.mrb[0].mxu0
        %v1393 = vadd.f32 0.0, %v1392
        %v1394 = vpop.f32.mrb[0].mxu0
        %v1395 = vpop.f32.mrb[0].mxu0
        %v1396 = vpop.f32.mrb[0].mxu0
        %1397 = vdwg.mxu0
        %v1398 = vadd.f32 %v672, %v1393
        %v1399 = vsel %vm675, %v1398, 0.0
        %1400 = vadd.xlane.f32.xlu0 %v1399
        %v1401 = vpop.xlane.xlu0 %1400
        %v1402 = vmul.f32 %v1401, %v679
        %v1403 = vsub.f32 %v1398, %v1402
        %v1404 = vmul.f32 %v1403, %v1403
        %v1405 = vsel %vm675, %v1404, 0.0
        %1406 = vadd.xlane.f32.xlu0 %v1405
        %v1407 = vpop.xlane.xlu0 %1406
        %v1408 = vmul.f32 %v1407, %v679
        %v1409 = vadd.f32 %v1408, 1e-05
        %v1410 = vrsqrt.pop %v1409
        %v1411 = vmul.f32 %v1403, %v1410
        %v1412 = vmul.f32 %v1411, %v694
        %v1413 = vadd.f32 %v1412, %v701
        %v1414 = vpack.c.bf16 %v1413, %v1413
        %v1415 = vld [vmem:[%s547] sm:$0xf]
        %v1416 = vld [vmem:[%s547 + $0x4] sm:$0xf]
        %v1417 = vld [vmem:[%s547 + $0x8] sm:$0xf]
        %v1418 = vld [vmem:[%s547 + $0xc] sm:$0xf]
        %v1419 = vld [vmem:[%s555] sm:$0x1]
        %v1421 = vlaneseq
        %v1422 = vshrl.u32 %v1421, 7
        %v1423 = vsub.s32 0, %v1422
        %v1424 = vrot.slane %v1419, %v1423
        %v1430 = vunpack.c.l.b16 %v1415
        %v1431 = vunpack.c.l.b16 %v1416
        %v1432 = vunpack.c.l.b16 %v1417
        %v1433 = vunpack.c.l.b16 %v1418
        %v1434 = vpack.c.b16 %v1431, %v1430
        %v1435 = vpack.c.b16 %v1433, %v1432
        %v1439 = vsel %vm675, %v1414, 0
        %1441 = vmatprep.subr.bf16.mxu0 0
        %1442 = vmatpush1.bf16.msra.mxu0 %v1434
        %1443 = vmatprep.subr.bf16.mxu0 0
        %1444 = vmatpush1.bf16.msra.mxu0 %v1435
        %1445 = vmatprep.subr.bf16.mxu0 0
        %1446 = vmatpush1.bf16.msra.mxu0 0
        %1447 = vmatprep.subr.bf16.mxu0 0
        %1448 = vmatpush1.bf16.msra.mxu0 0
        %1449 = vmatprep.subr.bf16.mxu0 0
        %1450 = vmatpush1.bf16.msra.mxu0 0
        %1451 = vmatprep.subr.bf16.mxu0 0
        %1452 = vmatpush1.bf16.msra.mxu0 0
        %1453 = vmatprep.subr.bf16.mxu0 0
        %1454 = vmatpush1.bf16.msra.mxu0 0
        %1455 = vmatprep.subr.bf16.mxu0 0
        %1456 = vmatpush1.bf16.msra.mxu0 0
        %1457 = vmatprep.subr.bf16.mxu0 0
        %1458 = vmatpush1.bf16.msra.mxu0 0
        %1459 = vmatprep.subr.bf16.mxu0 0
        %1460 = vmatpush1.bf16.msra.mxu0 0
        %1461 = vmatprep.subr.bf16.mxu0 0
        %1462 = vmatpush1.bf16.msra.mxu0 0
        %1463 = vmatprep.subr.bf16.mxu0 0
        %1464 = vmatpush1.bf16.msra.mxu0 0
        %1465 = vmatprep.subr.bf16.mxu0 0
        %1466 = vmatpush1.bf16.msra.mxu0 0
        %1467 = vmatprep.subr.bf16.mxu0 0
        %1468 = vmatpush1.bf16.msra.mxu0 0
        %1469 = vmatprep.subr.bf16.mxu0 0
        %1470 = vmatpush1.bf16.msra.mxu0 0
        %1471 = vmatprep.subr.bf16.mxu0 0
        %1472 = vmatpush1.bf16.msra.mxu0 0
        %1473 = vmatprep.mubr.bf16.mxu0 0
        %1474 = vmatmul.mubr.bf16.gmra.mrb[0].mxu0 %v1439
        %v1475 = vpop.f32.mrb[0].mxu0
        %v1476 = vadd.f32 %v1424, %v1475
        %v1477 = vpop.f32.mrb[0].mxu0
        %v1478 = vpop.f32.mrb[0].mxu0
        %v1479 = vpop.f32.mrb[0].mxu0
        %1480 = vdwg.mxu0
        %v1481 = vmul.f32 %v1476, 0.5
        %v1482 = vmul.f32 %v1476, 0.044715
        %v1483 = vmul.f32 %v1482, %v1476
        %v1484 = vmul.f32 %v1483, %v1476
        %v1485 = vadd.f32 %v1476, %v1484
        %v1486 = vmul.f32 %v1485, 0.7978846
        %v1487 = vtanh.pop %v1486
        %v1488 = vadd.f32 %v1487, 1.0
        %v1489 = vmul.f32 %v1481, %v1488
        %v1490 = vpack.c.bf16 %v1489, %v1489
        %v1491 = vld [vmem:[%s660] sm:$0xf]
        %v1492 = vld [vmem:[%s660 + $0x4] sm:$0xf]
        %v1493 = vld [vmem:[%s660 + $0x8] sm:$0xf]
        %v1494 = vld [vmem:[%s660 + $0xc] sm:$0xf]
        %v1495 = vld [vmem:[%s660 + $0x10] sm:$0xf]
        %v1496 = vld [vmem:[%s660 + $0x14] sm:$0xf]
        %v1497 = vld [vmem:[%s660 + $0x18] sm:$0xf]
        %v1498 = vld [vmem:[%s660 + $0x1c] sm:$0xf]
        %v1499 = vld [vmem:[%s663] sm:$0x1]
        %v1501 = vlaneseq
        %v1502 = vshrl.u32 %v1501, 7
        %v1503 = vsub.s32 0, %v1502
        %v1504 = vrot.slane %v1499, %v1503
        %v1514 = vunpack.c.l.b16 %v1491
        %v1515 = vunpack.c.l.b16 %v1492
        %v1516 = vunpack.c.l.b16 %v1493
        %v1517 = vunpack.c.l.b16 %v1494
        %v1518 = vunpack.c.l.b16 %v1495
        %v1519 = vunpack.c.l.b16 %v1496
        %v1520 = vunpack.c.l.b16 %v1497
        %v1521 = vunpack.c.l.b16 %v1498
        %v1522 = vpack.c.b16 %v1515, %v1514
        %v1523 = vpack.c.b16 %v1517, %v1516
        %v1524 = vpack.c.b16 %v1519, %v1518
        %v1525 = vpack.c.b16 %v1521, %v1520
        %vm1530 = vcmask 523264
        %v1532 = vsel %vm1530, %v1490, 0
        %1534 = vmatprep.subr.bf16.mxu0 0
        %1535 = vmatpush1.bf16.msra.mxu0 %v1522
        %1536 = vmatprep.subr.bf16.mxu0 0
        %1537 = vmatpush1.bf16.msra.mxu0 %v1523
        %1538 = vmatprep.subr.bf16.mxu0 0
        %1539 = vmatpush1.bf16.msra.mxu0 %v1524
        %1540 = vmatprep.subr.bf16.mxu0 0
        %1541 = vmatpush1.bf16.msra.mxu0 %v1525
        %1542 = vmatprep.subr.bf16.mxu0 0
        %1543 = vmatpush1.bf16.msra.mxu0 0
        %1544 = vmatprep.subr.bf16.mxu0 0
        %1545 = vmatpush1.bf16.msra.mxu0 0
        %1546 = vmatprep.subr.bf16.mxu0 0
        %1547 = vmatpush1.bf16.msra.mxu0 0
        %1548 = vmatprep.subr.bf16.mxu0 0
        %1549 = vmatpush1.bf16.msra.mxu0 0
        %1550 = vmatprep.subr.bf16.mxu0 0
        %1551 = vmatpush1.bf16.msra.mxu0 0
        %1552 = vmatprep.subr.bf16.mxu0 0
        %1553 = vmatpush1.bf16.msra.mxu0 0
        %1554 = vmatprep.subr.bf16.mxu0 0
        %1555 = vmatpush1.bf16.msra.mxu0 0
        %1556 = vmatprep.subr.bf16.mxu0 0
        %1557 = vmatpush1.bf16.msra.mxu0 0
        %1558 = vmatprep.subr.bf16.mxu0 0
        %1559 = vmatpush1.bf16.msra.mxu0 0
        %1560 = vmatprep.subr.bf16.mxu0 0
        %1561 = vmatpush1.bf16.msra.mxu0 0
        %1562 = vmatprep.subr.bf16.mxu0 0
        %1563 = vmatpush1.bf16.msra.mxu0 0
        %1564 = vmatprep.subr.bf16.mxu0 0
        %1565 = vmatpush1.bf16.msra.mxu0 0
        %1566 = vmatprep.mubr.bf16.mxu0 0
        %1567 = vmatmul.mubr.bf16.gmra.mrb[0].mxu0 %v1532
        %v1568 = vpop.f32.mrb[0].mxu0
        %v1569 = vadd.f32 %v1504, %v1568
        %v1570 = vpop.f32.mrb[0].mxu0
        %v1571 = vpop.f32.mrb[0].mxu0
        %v1572 = vpop.f32.mrb[0].mxu0
        %1573 = vdwg.mxu0
        %v1574 = vadd.f32 %v1398, %v1569
        %1575 = vst.msk [vmem:[#allocation2] sm:$0xff] %vm675, %v1574
        %p1576 = scmp.eq.s32.totalorder %s39, 1
        // Predicated region
        $region89: #{tpu_custom_call.1} parent=63 // pred_check
          %p1577 = pneg %p1576
        $region90: #{tpu_custom_call.1} parent=63 // pred_check_branch
          %1579 = sbr.rel (%p1577) target = $region92
        $region91: #{tpu_custom_call.1} parent=63 // pred_region
          %1580 = vst.msk [vmem:[%s637] sm:$0xff] %vm675, %v1574
        $region92: #{tpu_custom_call.1} parent=63 // pred_fallthru
          _
        %s1581 = sand.u32 %s340, 1
        %s1582 = scalar_lea.sflag [#allocation6], %s1581
        %s1583 = sand.u32 %s340, 1
        %s1584 = smul.addr %s1583, 8
        %s1585 = scalar_lea.vmem [#allocation13], %s1584
        // Predicated region
        $region93: #{tpu_custom_call.1} parent=63 // pred_check
          %p1586 = pneg %p350
        $region94: #{tpu_custom_call.1} parent=63 // pred_check_branch
          %1588 = sbr.rel (%p1586) target = $region96
        $region95: #{tpu_custom_call.1} parent=63 // pred_region
          %s1590 = ssub.s32 128, 128
          %1591 = vsyncadd %s1582, %s1590
          %s1592 = smul.addr %s38, 128
          %s1593 = scalar_lea.hbm %s11, %s1592
          %s1595 = sshll.u32 %s1585, 4
          %s1596 = int_to_ptr.vmem [resolvable:$true] %s1595
          %1598 = dma.vmem_to_hbm [thread:$0]  %s1596, 128, %s1593, %s1582
        $region96: #{tpu_custom_call.1} parent=63 // pred_fallthru
          _
      $region64: #{tpu_custom_call.1} parent=5 // pred_fallthru
        _
      %p1599 = scmp.le.s32.totalorder 2, %s29
      // Predicated region
      $region97: #{tpu_custom_call.1} parent=5 // pred_check
        %p1600 = pneg %p1599
      $region98: #{tpu_custom_call.1} parent=5 // pred_check_branch
        %1602 = sbr.rel (%p1600) target = $region100
      $region99: #{tpu_custom_call.1} parent=5 // pred_region
        %s1603 = ssub.s32 %s29, 2
        // Predicated region
        $region101: #{tpu_custom_call.1} parent=99 // pred_check
          %p1604 = pneg %p356
        $region102: #{tpu_custom_call.1} parent=99 // pred_check_branch
          %1606 = sbr.rel (%p1604) target = $region104
        $region103: #{tpu_custom_call.1} parent=99 // pred_region
          %s1607 = sand.u32 %s341, 1
          %s1608 = scalar_lea.sflag [#allocation6], %s1607
          %s1609 = sand.u32 %s341, 1
          %s1610 = smul.addr %s1609, 8
          %s1611 = scalar_lea.vmem [#allocation13], %s1610
          %1612 = dma.done %s1608, 128
        $region104: #{tpu_custom_call.1} parent=99 // pred_fallthru
          _
      $region100: #{tpu_custom_call.1} parent=5 // pred_fallthru
        _
    $region6: #{tpu_custom_call.1} parent=1 // loop_footer
      %s33 = sadd.s32 1, %s29
    $region7: #{tpu_custom_call.1} parent=1 // loop_footer_branch
      %28 = sbr.rel target = $region3
    $region8: #{tpu_custom_call.1} parent=1 // loop_exit
      _
    %1613 = vsyncpa [#allocation5], 1
    %s1614 = scalar_lea.sflag [#allocation5], 1
    %1615 = vsyncpa %s1614, 1
    %1616 = vsyncpa [#allocation8], 1
    %s1617 = scalar_lea.sflag [#allocation8], 1
    %1618 = vsyncpa %s1617, 1
    %1619 = vsyncpa [#allocation11], 1
    %s1620 = scalar_lea.sflag [#allocation11], 1
    %1621 = vsyncpa %s1620, 1
    %1622 = vsyncpa [#allocation6], 1
    %s1623 = scalar_lea.sflag [#allocation6], 1
    %1624 = vsyncpa %s1623, 1

</llo_original>
